<compile_context>
chip_gen: v5e
topology: v5e:2x2
jax: 0.10.0
libtpu: 0.0.40
codegen_flags: <defaults>
</compile_context>

<pallas_src>
import jax
import jax.numpy as jnp
from jax import lax
from jax.experimental import pallas as pl
from jax.experimental.pallas import tpu as pltpu


# ----------------------------- helpers -----------------------------

def _band_rows(h1: int, w1: int, budget_bytes: int = 8 * 1024 * 1024) -> int:
    """Largest divisor of H1 so one query band's live score tiles (both
    quadrants: f32 scores + f32 exp + bf16 exp) fit in `budget_bytes`."""
    m = h1 * w1
    per_row = 2 * w1 * m * (4 + 4 + 2)
    max_rows = max(1, budget_bytes // max(per_row, 1))
    band = 1
    for d in range(1, h1 + 1):
        if h1 % d == 0 and d <= max_rows:
            band = d
    return band


# ----------------------------- Pallas kernel -----------------------------

def _psnl_half_kernel(x_ref, wgth_ref, ww_ref, o_ref):
    """Fused NONLocalBlock2D forward for one (batch, vertical-half) tile.

    x_ref, o_ref : (C, H1, W)  one vertical half of one image (channel-major);
                   the left/right width-half quadrants are processed batched.
    wgth_ref     : (2C, C)     fused g / theta 1x1-conv weights (out, in)
    ww_ref       : (C, C)      output 1x1-conv weight (out, in)
    """
    C, H1, W = x_ref.shape
    W1 = W // 2
    M = H1 * W1
    band = _band_rows(H1, W1)
    n_bands = H1 // band
    tq = band * W1

    x_cm = x_ref[...].astype(jnp.float32)                        # (C, H1, W)

    # fused g / theta 1x1 convs: pointwise over space -> one channel matmul
    x_flat = x_cm.reshape(C, H1 * W)
    gth = jnp.dot(wgth_ref[...].astype(jnp.float32), x_flat,
                  preferred_element_type=jnp.float32)             # (2C, H1*W)
    g_full = gth[:C].reshape(C, H1, W)
    th_full = gth[C:].reshape(C, H1, W)
    # centered theta with the 1/C covariance scale folded in (a (C,*) op, so
    # the (M, M) score tile never needs rescaling).
    thc_full = (th_full - jnp.mean(th_full, axis=0, keepdims=True)) * (1.0 / C)

    def split_quadrants(a):                                       # (C,H1,W)->(2,C,M)
        return jnp.stack([a[:, :, :W1].reshape(C, M),
                          a[:, :, W1:].reshape(C, M)], axis=0)

    x_q = split_quadrants(x_cm)                                   # (2, C, M) f32
    g_bf = split_quadrants(g_full).astype(jnp.bfloat16)           # (2, C, M)
    th_bf = split_quadrants(th_full).astype(jnp.bfloat16)
    thc_bf = split_quadrants(thc_full).astype(jnp.bfloat16)

    # attention, query-row banded so the live score tile is only (2, tq, M)
    y_parts = []
    for t in range(n_bands):
        lo = t * tq
        thc_t = thc_bf[:, :, lo:lo + tq]                          # (2, C, tq)
        # f[q,i,j] = sum_c thc[q,c,i] * th[q,c,j]   (bf16 operands, f32 acc)
        f = lax.dot_general(thc_t, th_bf,
                            dimension_numbers=(((1,), (1,)), ((0,), (0,))),
                            preferred_element_type=jnp.float32)   # (2, tq, M)
        m = jnp.max(f, axis=-1, keepdims=True)
        e = jnp.exp(f - m)                                        # f32 softmax math
        l = jnp.sum(e, axis=-1)                                   # (2, tq)
        # y[q,c,i] = sum_j g[q,c,j] * e[q,i,j]      (channel-major output)
        y_t = lax.dot_general(g_bf, e.astype(jnp.bfloat16),
                              dimension_numbers=(((2,), (2,)), ((0,), (0,))),
                              preferred_element_type=jnp.float32)  # (2, C, tq)
        # softmax 1/l applied to the small (C, tq) result, not the score tile
        inv_l = pl.reciprocal(l, approx=True).reshape(2, 1, tq)
        y_parts.append(y_t * inv_l)
    y = y_parts[0] if n_bands == 1 else jnp.concatenate(y_parts, axis=-1)  # (2,C,M)

    # output 1x1 conv + residual, stitched back into the (C, H1, W) half
    ww = ww_ref[...].astype(jnp.float32)
    outs = []
    for q in range(2):
        wy = jnp.dot(ww, y[q], preferred_element_type=jnp.float32)  # (C, M)
        outs.append((wy + x_q[q]).reshape(C, H1, W1))
    o_ref[...] = jnp.concatenate(outs, axis=-1).astype(o_ref.dtype)


# ----------------------------- wrapper -----------------------------

def psnl_forward(x, w_g, w_theta, w_w):
    """PSNL forward.

    x                 : (B, C, H, W) NCHW input
    w_g, w_theta, w_w : (C, C, 1, 1) 1x1-conv weights (torch layout, no bias)
    returns           : (B, C, H, W)
    """
    B, C, H, W = x.shape
    assert H % 2 == 0 and W % 2 == 0, "PSNL quadrant split assumes even H, W"
    H1, W1 = H // 2, W // 2
    M = H1 * W1

    # transpose-free view: (B, C, H, W) -> (B, C, 2, H1, W); quadrant
    # extraction itself happens via the BlockSpec / in-kernel width split.
    x5 = x.reshape(B, C, 2, H1, W)

    # fused g/theta weight (2C, C) and output weight (C, C), (out, in) layout
    wgth = jnp.concatenate([w_g.reshape(C, C), w_theta.reshape(C, C)], axis=0)
    ww = w_w.reshape(C, C)

    half_spec = pl.BlockSpec((None, C, None, H1, W), lambda b, v: (b, 0, v, 0, 0))
    wgth_spec = pl.BlockSpec((2 * C, C), lambda b, v: (0, 0))   # VMEM-resident
    ww_spec = pl.BlockSpec((C, C), lambda b, v: (0, 0))         # VMEM-resident

    # explicit scoped-VMEM budget sized from the actual footprint
    band = _band_rows(H1, W1)
    tq = band * W1
    score_bytes = 2 * tq * M * (4 + 4 + 2)          # f32 scores + f32 exp + bf16 exp
    resident_bytes = 2 * C * M * (4 * 4 + 2 * 3)    # x/g/th/thc/y + bf16 copies
    io_bytes = 8 * C * H1 * W * x.dtype.itemsize    # double-buffered in/out blocks
    vmem_limit = int(min(64 * 2 ** 20,
                         max(32 * 2 ** 20,
                             2 * (score_bytes + resident_bytes) + io_bytes)))

    out = pl.pallas_call(
        _psnl_half_kernel,
        out_shape=jax.ShapeDtypeStruct((B, C, 2, H1, W), x.dtype),
        grid=(B, 2),
        in_specs=[half_spec, wgth_spec, ww_spec],
        out_specs=half_spec,
        compiler_params=pltpu.CompilerParams(
            dimension_semantics=("parallel", "parallel"),
            vmem_limit_bytes=vmem_limit),
    )(x5, wgth, ww)

    return out.reshape(B, C, H, W)   # transpose-free merge of (2, H1) -> H


# ----------------------------- pure-JAX reference -----------------------------

def psnl_reference(x, w_g, w_theta, w_w):
    """Direct transcription of the torch module (quadrant slicing + block)."""
    B, C, H, W = x.shape
    H1, W1 = H // 2, W // 2
    wg = w_g.reshape(C, C)
    wth = w_theta.reshape(C, C)
    ww = w_w.reshape(C, C)

    def non_local(xs):
        b, c, h, w = xs.shape
        xf = xs.reshape(b, c, h * w).transpose(0, 2, 1)            # (b, M, C)
        g_x = xf @ wg.T
        th = xf @ wth.T
        th_c = th - th.mean(axis=-1, keepdims=True)
        f = jnp.einsum('bmc,bnc->bmn', th_c, th) / c
        attn = jax.nn.softmax(f, axis=-1)
        y = attn @ g_x
        w_y = y @ ww.T
        z = w_y + xf
        return z.transpose(0, 2, 1).reshape(b, c, h, w)

    lu = non_local(x[:, :, :H1, :W1])
    ld = non_local(x[:, :, H1:, :W1])
    ru = non_local(x[:, :, :H1, W1:])
    rd = non_local(x[:, :, H1:, W1:])
    top = jnp.concatenate([lu, ru], axis=3)
    bot = jnp.concatenate([ld, rd], axis=3)
    return jnp.concatenate([top, bot], axis=2)


# ----------------------------- main -----------------------------

if __name__ == "__main__":
    # PSNL(channels=4) on a (2, 4, 16, 16) input -> 8x8 quadrants, M = 64.
    B, C, H, W = 2, 4, 16, 16

    key = jax.random.PRNGKey(0)
    kx, kg, kt, kw = jax.random.split(key, 4)
    x = jax.random.normal(kx, (B, C, H, W), jnp.float32)
    # NOTE: torch initializes W.weight to zeros (so z == x at init); random
    # weights are used here to exercise the full compute path -- the forward
    # semantics are identical for any weight values.
    w_g = 0.25 * jax.random.normal(kg, (C, C, 1, 1), jnp.float32)
    w_theta = 0.25 * jax.random.normal(kt, (C, C, 1, 1), jnp.float32)
    w_w = 0.25 * jax.random.normal(kw, (C, C, 1, 1), jnp.float32)

    out = jax.block_until_ready(jax.jit(psnl_forward)(x, w_g, w_theta, w_w))

    assert out.shape == (B, C, H, W), out.shape
    assert bool(jnp.all(jnp.isfinite(out)))

    ref = psnl_reference(x, w_g, w_theta, w_w)
    max_err = float(jnp.max(jnp.abs(out - ref)))
    assert max_err < 5e-2, f"mismatch vs reference: {max_err}"

    print("KERNEL_OK")
</pallas_src>

<mosaic_0001>
module attributes {stable_mosaic.version = 11 : i64} {
  func.func @_psnl_half_kernel(%arg0: i32, %arg1: i32, %arg2: memref<1x4x1x8x16xf32, #tpu.memory_space<vmem>>, %arg3: memref<8x4xf32, #tpu.memory_space<vmem>>, %arg4: memref<4x4xf32, #tpu.memory_space<vmem>>, %arg5: memref<1x4x1x8x16xf32, #tpu.memory_space<vmem>>) attributes {dimension_semantics = [#tpu.dimension_semantics<parallel>, #tpu.dimension_semantics<parallel>], iteration_bounds = array<i64: 2, 2>, scalar_prefetch = 0 : i64, scratch_operands = 0 : i64, tpu.core_type = #tpu.core_type<tc>, window_params = [{transform_indices = @transform_0, window_bounds = array<i64: 1, 4, 1, 8, 16>}, {pipeline_mode = #tpu.pipeline_mode<synchronous>, transform_indices = @transform_1, window_bounds = array<i64: 8, 4>}, {pipeline_mode = #tpu.pipeline_mode<synchronous>, transform_indices = @transform_2, window_bounds = array<i64: 4, 4>}, {transform_indices = @transform_3, window_bounds = array<i64: 1, 4, 1, 8, 16>}]} {
    %c0 = arith.constant 0 : index
    %c0_0 = arith.constant 0 : index
    %c0_1 = arith.constant 0 : index
    %c0_2 = arith.constant 0 : index
    %c0_3 = arith.constant 0 : index
    %0 = vector.load %arg2[%c0, %c0_0, %c0_1, %c0_2, %c0_3] : memref<1x4x1x8x16xf32, #tpu.memory_space<vmem>>, vector<1x4x1x8x16xf32>
    %1 = vector.shape_cast %0 : vector<1x4x1x8x16xf32> to vector<4x8x16xf32>
    %2 = vector.shape_cast %1 : vector<4x8x16xf32> to vector<4x128xf32>
    %c0_4 = arith.constant 0 : index
    %c0_5 = arith.constant 0 : index
    %3 = vector.load %arg3[%c0_4, %c0_5] : memref<8x4xf32, #tpu.memory_space<vmem>>, vector<8x4xf32>
    %cst = arith.constant dense<0.000000e+00> : vector<8x128xf32>
    %4 = tpu.matmul %3, %2, %cst {dimension_numbers = #tpu.dot_dimension_numbers<[1], [0], [0], [1], [0, 0, 1, 1], [], []>} : vector<8x4xf32>, vector<4x128xf32>, vector<8x128xf32> -> vector<8x128xf32>
    %5 = vector.extract_strided_slice %4 {offsets = [0, 0], sizes = [4, 128], strides = [1, 1]} : vector<8x128xf32> to vector<4x128xf32>
    %6 = vector.shape_cast %5 : vector<4x128xf32> to vector<4x8x16xf32>
    %7 = vector.extract_strided_slice %4 {offsets = [4, 0], sizes = [4, 128], strides = [1, 1]} : vector<8x128xf32> to vector<4x128xf32>
    %8 = vector.shape_cast %7 : vector<4x128xf32> to vector<4x8x16xf32>
    %cst_6 = arith.constant dense<0.000000e+00> : vector<8x16xf32>
    %9 = vector.multi_reduction <add>, %8, %cst_6 [0] : vector<4x8x16xf32> to vector<8x16xf32>
    %10 = vector.shape_cast %9 : vector<8x16xf32> to vector<1x8x16xf32>
    %cst_7 = arith.constant 4.000000e+00 : f32
    %11 = vector.broadcast %cst_7 : f32 to vector<1x8x16xf32>
    %12 = arith.divf %10, %11 : vector<1x8x16xf32>
    %13 = vector.broadcast %12 : vector<1x8x16xf32> to vector<4x8x16xf32>
    %14 = arith.subf %8, %13 : vector<4x8x16xf32>
    %cst_8 = arith.constant 2.500000e-01 : f32
    %15 = vector.broadcast %cst_8 : f32 to vector<4x8x16xf32>
    %16 = arith.mulf %14, %15 : vector<4x8x16xf32>
    %17 = vector.extract_strided_slice %1 {offsets = [0, 0, 0], sizes = [4, 8, 8], strides = [1, 1, 1]} : vector<4x8x16xf32> to vector<4x8x8xf32>
    %18 = vector.shape_cast %17 : vector<4x8x8xf32> to vector<4x64xf32>
    %19 = vector.extract_strided_slice %1 {offsets = [0, 0, 8], sizes = [4, 8, 8], strides = [1, 1, 1]} : vector<4x8x16xf32> to vector<4x8x8xf32>
    %20 = vector.shape_cast %19 : vector<4x8x8xf32> to vector<4x64xf32>
    %21 = vector.shape_cast %18 : vector<4x64xf32> to vector<1x4x64xf32>
    %22 = vector.shape_cast %20 : vector<4x64xf32> to vector<1x4x64xf32>
    %23 = tpu.concatenate %21, %22 in 0 : vector<1x4x64xf32>, vector<1x4x64xf32> -> vector<2x4x64xf32>
    %24 = vector.extract_strided_slice %6 {offsets = [0, 0, 0], sizes = [4, 8, 8], strides = [1, 1, 1]} : vector<4x8x16xf32> to vector<4x8x8xf32>
    %25 = vector.shape_cast %24 : vector<4x8x8xf32> to vector<4x64xf32>
    %26 = vector.extract_strided_slice %6 {offsets = [0, 0, 8], sizes = [4, 8, 8], strides = [1, 1, 1]} : vector<4x8x16xf32> to vector<4x8x8xf32>
    %27 = vector.shape_cast %26 : vector<4x8x8xf32> to vector<4x64xf32>
    %28 = vector.shape_cast %25 : vector<4x64xf32> to vector<1x4x64xf32>
    %29 = vector.shape_cast %27 : vector<4x64xf32> to vector<1x4x64xf32>
    %30 = tpu.concatenate %28, %29 in 0 : vector<1x4x64xf32>, vector<1x4x64xf32> -> vector<2x4x64xf32>
    %31 = arith.truncf %30 : vector<2x4x64xf32> to vector<2x4x64xbf16>
    %32 = vector.extract_strided_slice %8 {offsets = [0, 0, 0], sizes = [4, 8, 8], strides = [1, 1, 1]} : vector<4x8x16xf32> to vector<4x8x8xf32>
    %33 = vector.shape_cast %32 : vector<4x8x8xf32> to vector<4x64xf32>
    %34 = vector.extract_strided_slice %8 {offsets = [0, 0, 8], sizes = [4, 8, 8], strides = [1, 1, 1]} : vector<4x8x16xf32> to vector<4x8x8xf32>
    %35 = vector.shape_cast %34 : vector<4x8x8xf32> to vector<4x64xf32>
    %36 = vector.shape_cast %33 : vector<4x64xf32> to vector<1x4x64xf32>
    %37 = vector.shape_cast %35 : vector<4x64xf32> to vector<1x4x64xf32>
    %38 = tpu.concatenate %36, %37 in 0 : vector<1x4x64xf32>, vector<1x4x64xf32> -> vector<2x4x64xf32>
    %39 = arith.truncf %38 : vector<2x4x64xf32> to vector<2x4x64xbf16>
    %40 = vector.extract_strided_slice %16 {offsets = [0, 0, 0], sizes = [4, 8, 8], strides = [1, 1, 1]} : vector<4x8x16xf32> to vector<4x8x8xf32>
    %41 = vector.shape_cast %40 : vector<4x8x8xf32> to vector<4x64xf32>
    %42 = vector.extract_strided_slice %16 {offsets = [0, 0, 8], sizes = [4, 8, 8], strides = [1, 1, 1]} : vector<4x8x16xf32> to vector<4x8x8xf32>
    %43 = vector.shape_cast %42 : vector<4x8x8xf32> to vector<4x64xf32>
    %44 = vector.shape_cast %41 : vector<4x64xf32> to vector<1x4x64xf32>
    %45 = vector.shape_cast %43 : vector<4x64xf32> to vector<1x4x64xf32>
    %46 = tpu.concatenate %44, %45 in 0 : vector<1x4x64xf32>, vector<1x4x64xf32> -> vector<2x4x64xf32>
    %47 = arith.truncf %46 : vector<2x4x64xf32> to vector<2x4x64xbf16>
    %cst_9 = arith.constant dense<0.000000e+00> : vector<2x64x64xf32>
    %48 = tpu.matmul %47, %39, %cst_9 {dimension_numbers = #tpu.dot_dimension_numbers<[1], [1], [2], [2], [0, 0, 0, 2, 1, 2], [0], [0]>} : vector<2x4x64xbf16>, vector<2x4x64xbf16>, vector<2x64x64xf32> -> vector<2x64x64xf32>
    %cst_10 = arith.constant dense<0xFF800000> : vector<2x64xf32>
    %49 = vector.multi_reduction <maximumf>, %48, %cst_10 [2] : vector<2x64x64xf32> to vector<2x64xf32>
    %50 = vector.shape_cast %49 : vector<2x64xf32> to vector<2x64x1xf32>
    %51 = vector.broadcast %50 : vector<2x64x1xf32> to vector<2x64x64xf32>
    %52 = arith.subf %48, %51 : vector<2x64x64xf32>
    %53 = math.exp %52 : vector<2x64x64xf32>
    %cst_11 = arith.constant dense<0.000000e+00> : vector<2x64xf32>
    %54 = vector.multi_reduction <add>, %53, %cst_11 [2] : vector<2x64x64xf32> to vector<2x64xf32>
    %55 = arith.truncf %53 : vector<2x64x64xf32> to vector<2x64x64xbf16>
    %cst_12 = arith.constant dense<0.000000e+00> : vector<2x4x64xf32>
    %56 = tpu.matmul %31, %55, %cst_12 {dimension_numbers = #tpu.dot_dimension_numbers<[2], [2], [1], [1], [0, 0, 0, 1, 1, 1], [0], [0]>} : vector<2x4x64xbf16>, vector<2x64x64xbf16>, vector<2x4x64xf32> -> vector<2x4x64xf32>
    %57 = tpu.reciprocal %54 {approx = true} : vector<2x64xf32> -> vector<2x64xf32>
    %58 = vector.shape_cast %57 : vector<2x64xf32> to vector<2x1x64xf32>
    %59 = vector.broadcast %58 : vector<2x1x64xf32> to vector<2x4x64xf32>
    %60 = arith.mulf %56, %59 : vector<2x4x64xf32>
    %c0_13 = arith.constant 0 : index
    %c0_14 = arith.constant 0 : index
    %61 = vector.load %arg4[%c0_13, %c0_14] : memref<4x4xf32, #tpu.memory_space<vmem>>, vector<4x4xf32>
    %62 = vector.extract_strided_slice %60 {offsets = [0, 0, 0], sizes = [1, 4, 64], strides = [1, 1, 1]} : vector<2x4x64xf32> to vector<1x4x64xf32>
    %63 = vector.shape_cast %62 : vector<1x4x64xf32> to vector<4x64xf32>
    %cst_15 = arith.constant dense<0.000000e+00> : vector<4x64xf32>
    %64 = tpu.matmul %61, %63, %cst_15 {dimension_numbers = #tpu.dot_dimension_numbers<[1], [0], [0], [1], [0, 0, 1, 1], [], []>} : vector<4x4xf32>, vector<4x64xf32>, vector<4x64xf32> -> vector<4x64xf32>
    %65 = vector.extract_strided_slice %23 {offsets = [0, 0, 0], sizes = [1, 4, 64], strides = [1, 1, 1]} : vector<2x4x64xf32> to vector<1x4x64xf32>
    %66 = vector.shape_cast %65 : vector<1x4x64xf32> to vector<4x64xf32>
    %67 = arith.addf %64, %66 : vector<4x64xf32>
    %68 = vector.shape_cast %67 : vector<4x64xf32> to vector<4x8x8xf32>
    %69 = vector.extract_strided_slice %60 {offsets = [1, 0, 0], sizes = [1, 4, 64], strides = [1, 1, 1]} : vector<2x4x64xf32> to vector<1x4x64xf32>
    %70 = vector.shape_cast %69 : vector<1x4x64xf32> to vector<4x64xf32>
    %cst_16 = arith.constant dense<0.000000e+00> : vector<4x64xf32>
    %71 = tpu.matmul %61, %70, %cst_16 {dimension_numbers = #tpu.dot_dimension_numbers<[1], [0], [0], [1], [0, 0, 1, 1], [], []>} : vector<4x4xf32>, vector<4x64xf32>, vector<4x64xf32> -> vector<4x64xf32>
    %72 = vector.extract_strided_slice %23 {offsets = [1, 0, 0], sizes = [1, 4, 64], strides = [1, 1, 1]} : vector<2x4x64xf32> to vector<1x4x64xf32>
    %73 = vector.shape_cast %72 : vector<1x4x64xf32> to vector<4x64xf32>
    %74 = arith.addf %71, %73 : vector<4x64xf32>
    %75 = vector.shape_cast %74 : vector<4x64xf32> to vector<4x8x8xf32>
    %76 = tpu.concatenate %68, %75 in 2 : vector<4x8x8xf32>, vector<4x8x8xf32> -> vector<4x8x16xf32>
    %c0_17 = arith.constant 0 : index
    %c0_18 = arith.constant 0 : index
    %c0_19 = arith.constant 0 : index
    %c0_20 = arith.constant 0 : index
    %c0_21 = arith.constant 0 : index
    %77 = vector.load %arg5[%c0_17, %c0_18, %c0_19, %c0_20, %c0_21] : memref<1x4x1x8x16xf32, #tpu.memory_space<vmem>>, vector<1x4x1x8x16xf32>
    %78 = vector.shape_cast %77 : vector<1x4x1x8x16xf32> to vector<4x8x16xf32>
    %79 = vector.shape_cast %76 : vector<4x8x16xf32> to vector<1x4x1x8x16xf32>
    tpu.vector_store %arg5[%c0_17, %c0_18, %c0_19, %c0_20, %c0_21], %79 {strides = array<i32>} : memref<1x4x1x8x16xf32, #tpu.memory_space<vmem>>, vector<1x4x1x8x16xf32>,
    return
  }
  func.func @transform_0(%arg0: i32, %arg1: i32) -> (i32, i32, i32, i32, i32) {
    %c0_i32 = arith.constant 0 : i32
    %c0_i32_0 = arith.constant 0 : i32
    %c0_i32_1 = arith.constant 0 : i32
    %c0_i32_2 = arith.constant 0 : i32
    return %arg0, %c0_i32, %arg1, %c0_i32_0, %c0_i32_1 : i32, i32, i32, i32, i32
  }
  func.func @transform_1(%arg0: i32, %arg1: i32) -> (i32, i32) {
    %c0_i32 = arith.constant 0 : i32
    %c0_i32_0 = arith.constant 0 : i32
    %c0_i32_1 = arith.constant 0 : i32
    return %c0_i32, %c0_i32_0 : i32, i32
  }
  func.func @transform_2(%arg0: i32, %arg1: i32) -> (i32, i32) {
    %c0_i32 = arith.constant 0 : i32
    %c0_i32_0 = arith.constant 0 : i32
    %c0_i32_1 = arith.constant 0 : i32
    return %c0_i32, %c0_i32_0 : i32, i32
  }
  func.func @transform_3(%arg0: i32, %arg1: i32) -> (i32, i32, i32, i32, i32) {
    %c0_i32 = arith.constant 0 : i32
    %c0_i32_0 = arith.constant 0 : i32
    %c0_i32_1 = arith.constant 0 : i32
    %c0_i32_2 = arith.constant 0 : i32
    return %arg0, %c0_i32, %arg1, %c0_i32_0, %c0_i32_1 : i32, i32, i32, i32, i32
  }
}

</mosaic_0001>

<llo_original>
// kernel: psnl_forward.1
$region0: #{psnl_forward.1}
  #allocation0 [shape = 'u32[]', space=smem, size = 0x4, offset = 0x4, fixed_abs, tag = 'smem constant byte address 0x4 - core index']
  #allocation1 [shape = 'u32[72,128]{1,0:T(1,128)}', space=vmem, size = 0x9000, scoped, tag = 'internal scratch']
  %s0 = inlined_call_operand.hbm [shape: f32[2,4,2,8,16], index: 0, kind: input, shape index: {}]
  %s1 = inlined_call_operand.vmem [shape: f32[8,4], index: 1, kind: input, shape index: {}]
  %s2 = inlined_call_operand.vmem [shape: f32[4,4], index: 2, kind: input, shape index: {}]
  %s3 = inlined_call_operand.hbm [shape: f32[2,4,2,8,16], index: 3, kind: output, shape index: {}]
  %s4 = sld [smem:[#allocation0]]
  $region49: #{psnl_forward.1} parent=0
    _
  %s6 = ssub.s32 1, %s4
  %s7 = scalar_select 0, %s6, %s4
  $region1: #{psnl_forward.1} parent=0
    #allocation2 [shape = 'u8[32768]{0}', space=vmem, size = 0x8000, scoped, tag = 'input window, operand 0']
    #allocation3 [shape = 's32[2]{0}', space=sflag, size = 0x8, scoped, tag = 'scoped memory for psnl_forward.1']
    #allocation4 [shape = 's32[2]{0}', space=sflag, size = 0x8, scoped, tag = 'scoped memory for psnl_forward.1']
    #allocation5 [shape = 'u8[32768]{0}', space=vmem, size = 0x8000, scoped, tag = 'output window, operand 0']
    %8 = vsyncpa [#allocation3], 0
    %s9 = scalar_lea.sflag [#allocation3], 1
    %10 = vsyncpa %s9, 0
    %11 = vsyncpa [#allocation4], 0
    %s12 = scalar_lea.sflag [#allocation4], 1
    %13 = vsyncpa %s12, 0
    loop: start=0, step=1, limit=6
    $region2: #{psnl_forward.1} parent=1 // loop_pre_header
      _
    $region3: #{psnl_forward.1} parent=1 // loop_header
      %s15 = sphi 0, %s19
      %p16 = scmp.ge.s32.totalorder %s15, 6
      %s22 = sphi 0, %s34
      %s23 = sphi 0, %s30
      %s24 = sphi 0, %s22
      %s25 = sphi 0, %s23
      %s26 = sphi 0, %s24
      %s27 = sphi 0, %s25
      %s39 = sphi 0, %s41
      %s42 = sphi 0, %s39
      %s43 = sphi 0, %s42
      %s59 = sphi 0, %s43
      %s63 = sphi 0, %s63
      %s65 = sphi 0, %s63
      %s66 = sphi 0, %s65
      %s80 = sphi 0, %s66
      %s84 = sphi 0, %s84
      %s86 = sphi 0, %s84
      %s87 = sphi 0, %s86
      %s101 = sphi 0, %s87
      %s109 = sphi 0, %s111
      %s112 = sphi 0, %s109
      %s113 = sphi 0, %s112
      %s129 = sphi 0, %s113
    $region4: #{psnl_forward.1} parent=1 // loop_header_branch
      %18 = sbr.rel (%p16) target = $region8
    $region5: #{psnl_forward.1} parent=1 // loop_body
      %s20 = ssub.s32 %s15, 1
      %s21 = ssub.s32 %s15, 2
      %s28 = sadd.s32 1, %s23
      %p29 = scmp.ge.s32.totalorder %s28, 2
      %s30 = scalar_select %p29, 0, %s28
      %s31 = sadd.s32 1, %s22
      %s32 = scalar_select %p29, %s31, %s22
      %p33 = scmp.ge.s32.totalorder %s32, 2
      %s34 = scalar_select %p33, 0, %s32
      %s35 = ssub.s32 %s22, %s34
      %s36 = ssub.s32 %s23, %s30
      %s37 = sor.u32 %s35, %s36
      %p38 = scmp.eq.s32.totalorder %s37, 0
      %s40 = sadd.s32 %s39, 1
      %s41 = scalar_select %p38, %s39, %s40
      %p44 = pneg %p38
      %p45 = scmp.eq.s32.totalorder %s15, 3
      %p46 = por %p44, %p45
      %p47 = scmp.ne.s32.totalorder %s39, %s42
      %p48 = scmp.eq.s32.totalorder %s15, 0
      %p49 = por %p47, %p48
      %p50 = scmp.ne.s32.totalorder %s39, %s42
      %p51 = scmp.eq.s32.totalorder %s20, 3
      %p52 = por %p50, %p51
      %p53 = scmp.ne.s32.totalorder %s42, %s43
      %p54 = scmp.eq.s32.totalorder %s20, 0
      %p55 = por %p53, %p54
      %p56 = scmp.ne.s32.totalorder %s42, %s43
      %p57 = scmp.eq.s32.totalorder %s21, 3
      %p58 = por %p56, %p57
      %p60 = scmp.ne.s32.totalorder %s43, %s59
      %p61 = scmp.eq.s32.totalorder %s21, 0
      %p62 = por %p60, %p61
      %s64 = sadd.s32 %s63, 1
      %p67 = scmp.eq.s32.totalorder %s15, 3
      %p68 = scmp.ne.s32.totalorder %s63, %s65
      %p69 = scmp.eq.s32.totalorder %s15, 0
      %p70 = por %p68, %p69
      %p71 = scmp.ne.s32.totalorder %s63, %s65
      %p72 = scmp.eq.s32.totalorder %s20, 3
      %p73 = por %p71, %p72
      %p74 = scmp.ne.s32.totalorder %s65, %s66
      %p75 = scmp.eq.s32.totalorder %s20, 0
      %p76 = por %p74, %p75
      %p77 = scmp.ne.s32.totalorder %s65, %s66
      %p78 = scmp.eq.s32.totalorder %s21, 3
      %p79 = por %p77, %p78
      %p81 = scmp.ne.s32.totalorder %s66, %s80
      %p82 = scmp.eq.s32.totalorder %s21, 0
      %p83 = por %p81, %p82
      %s85 = sadd.s32 %s84, 1
      %p88 = scmp.eq.s32.totalorder %s15, 3
      %p89 = scmp.ne.s32.totalorder %s84, %s86
      %p90 = scmp.eq.s32.totalorder %s15, 0
      %p91 = por %p89, %p90
      %p92 = scmp.ne.s32.totalorder %s84, %s86
      %p93 = scmp.eq.s32.totalorder %s20, 3
      %p94 = por %p92, %p93
      %p95 = scmp.ne.s32.totalorder %s86, %s87
      %p96 = scmp.eq.s32.totalorder %s20, 0
      %p97 = por %p95, %p96
      %p98 = scmp.ne.s32.totalorder %s86, %s87
      %p99 = scmp.eq.s32.totalorder %s21, 3
      %p100 = por %p98, %p99
      %p102 = scmp.ne.s32.totalorder %s87, %s101
      %p103 = scmp.eq.s32.totalorder %s21, 0
      %p104 = por %p102, %p103
      %s105 = ssub.s32 %s22, %s34
      %s106 = ssub.s32 %s23, %s30
      %s107 = sor.u32 %s105, %s106
      %p108 = scmp.eq.s32.totalorder %s107, 0
      %s110 = sadd.s32 %s109, 1
      %s111 = scalar_select %p108, %s109, %s110
      %p114 = pneg %p108
      %p115 = scmp.eq.s32.totalorder %s15, 3
      %p116 = por %p114, %p115
      %p117 = scmp.ne.s32.totalorder %s109, %s112
      %p118 = scmp.eq.s32.totalorder %s15, 0
      %p119 = por %p117, %p118
      %p120 = scmp.ne.s32.totalorder %s109, %s112
      %p121 = scmp.eq.s32.totalorder %s20, 3
      %p122 = por %p120, %p121
      %p123 = scmp.ne.s32.totalorder %s112, %s113
      %p124 = scmp.eq.s32.totalorder %s20, 0
      %p125 = por %p123, %p124
      %p126 = scmp.ne.s32.totalorder %s112, %s113
      %p127 = scmp.eq.s32.totalorder %s21, 3
      %p128 = por %p126, %p127
      %p130 = scmp.ne.s32.totalorder %s113, %s129
      %p131 = scmp.eq.s32.totalorder %s21, 0
      %p132 = por %p130, %p131
      %p133 = scmp.le.s32.totalorder 1, %s15
      %p134 = scmp.lt.s32.totalorder %s15, 5
      %p135 = pnand %p133, %p134
      %p136 = pneg %p135
      // Predicated region
      $region9: #{psnl_forward.1} parent=5 // pred_check
        _
      $region10: #{psnl_forward.1} parent=5 // pred_check_branch
        %138 = sbr.rel (%p135) target = $region12
      $region11: #{psnl_forward.1} parent=5 // pred_region
        %s139 = ssub.s32 %s15, 1
        // Predicated region
        $region13: #{psnl_forward.1} parent=11 // pred_check
          %p140 = pneg %p76
        $region14: #{psnl_forward.1} parent=11 // pred_check_branch
          %142 = sbr.rel (%p140) target = $region16
        $region15: #{psnl_forward.1} parent=11 // pred_region
          _
        $region16: #{psnl_forward.1} parent=11 // pred_fallthru
          _
        // Predicated region
        $region17: #{psnl_forward.1} parent=11 // pred_check
          %p143 = pneg %p97
        $region18: #{psnl_forward.1} parent=11 // pred_check_branch
          %145 = sbr.rel (%p143) target = $region20
        $region19: #{psnl_forward.1} parent=11 // pred_region
          _
        $region20: #{psnl_forward.1} parent=11 // pred_fallthru
          _
      $region12: #{psnl_forward.1} parent=5 // pred_fallthru
        _
      %p146 = scmp.lt.s32.totalorder %s15, 4
      // Predicated region
      $region21: #{psnl_forward.1} parent=5 // pred_check
        %p147 = pneg %p146
      $region22: #{psnl_forward.1} parent=5 // pred_check_branch
        %149 = sbr.rel (%p147) target = $region24
      $region23: #{psnl_forward.1} parent=5 // pred_region
        // Predicated region
        $region25: #{psnl_forward.1} parent=23 // pred_check
          %p150 = pneg %p49
        $region26: #{psnl_forward.1} parent=23 // pred_check_branch
          %152 = sbr.rel (%p150) target = $region28
        $region27: #{psnl_forward.1} parent=23 // pred_region
          %s153 = sand.u32 %s39, 1
          %s154 = scalar_lea.sflag [#allocation3], %s153
          %s155 = sand.u32 %s39, 1
          %s156 = smul.addr %s155, 32
          %s157 = scalar_lea.vmem [#allocation2], %s156
          %159 = vsyncadd %s154, 0
          %s160 = smul.addr %s22, 8
          %s161 = sadd.s32 %s23, %s160
          %s162 = smul.addr %s161, 8
          %s163 = scalar_lea.hbm %s0, %s162
          %s164 = sshll.u32 %s163, 4
          %s165 = int_to_ptr.hbm [resolvable:$true] %s164
          %s166 = sshll.u32 %s157, 4
          %s167 = int_to_ptr.vmem [resolvable:$true] %s166
          %172 = dma.hbm_to_vmem [thread:$0]  %s165, 512, %s167, %s154, 256, 128, 8
        $region28: #{psnl_forward.1} parent=23 // pred_fallthru
          _
      $region24: #{psnl_forward.1} parent=5 // pred_fallthru
        _
      %p173 = scmp.le.s32.totalorder 1, %s15
      %p174 = scmp.lt.s32.totalorder %s15, 5
      %p175 = pnand %p173, %p174
      %p176 = pneg %p175
      // Predicated region
      $region29: #{psnl_forward.1} parent=5 // pred_check
        _
      $region30: #{psnl_forward.1} parent=5 // pred_check_branch
        %178 = sbr.rel (%p175) target = $region32
      $region31: #{psnl_forward.1} parent=5 // pred_region
        %s179 = ssub.s32 %s15, 1
        %s180 = sand.u32 %s42, 1
        %s181 = scalar_lea.sflag [#allocation3], %s180
        %s182 = sand.u32 %s42, 1
        %s183 = smul.addr %s182, 32
        %s184 = scalar_lea.vmem [#allocation2], %s183
        // Predicated region
        $region33: #{psnl_forward.1} parent=31 // pred_check
          %p185 = pneg %p55
        $region34: #{psnl_forward.1} parent=31 // pred_check_branch
          %187 = sbr.rel (%p185) target = $region36
        $region35: #{psnl_forward.1} parent=31 // pred_region
          %189 = dma.done %s181, 512
        $region36: #{psnl_forward.1} parent=31 // pred_fallthru
          _
        %s190 = sand.u32 %s42, 1
        %s191 = scalar_lea.sflag [#allocation3], %s190
        %s192 = sand.u32 %s42, 1
        %s193 = smul.addr %s192, 32
        %s194 = scalar_lea.vmem [#allocation2], %s193
        %p195 = pneg %p55
        %p196 = pneg %p52
        %p197 = pneg %p76
        %p198 = pneg %p73
        %p199 = pneg %p97
        %p200 = pneg %p94
        %p201 = pneg %p125
        %p202 = pneg %p122
        %s203 = sand.u32 %s112, 1
        %s204 = scalar_lea.sflag [#allocation4], %s203
        %s205 = sand.u32 %s112, 1
        %s206 = smul.addr %s205, 32
        %s207 = scalar_lea.vmem [#allocation5], %s206
        %v209 = vld [vmem:[%s184] sm:$0xff]
        %v210 = vld [vmem:[%s184 + $0x8] sm:$0xff]
        %v211 = vld [vmem:[%s184 + $0x10] sm:$0xff]
        %v212 = vld [vmem:[%s184 + $0x18] sm:$0xff]
        %v213 = vrot.slane %v211, 4
        %vm214 = vcmask 1047556
        %v215 = vsel %vm214, %v213, %v209
        %v216 = vrot.slane %v209, 4
        %v217 = vsel %vm214, %v211, %v216
        %v219 = vunpack.c.l.s4 1983009808
        %v220 = vunpack.c.0.s8 %v219
        %v221 = vperm.slane %v215, %v220
        %v223 = vunpack.c.l.s4 1983009808
        %v224 = vunpack.c.0.s8 %v223
        %v225 = vperm.slane %v217, %v224
        %v226 = vrot.slane %v212, 4
        %v227 = vsel %vm214, %v226, %v210
        %v228 = vrot.slane %v210, 4
        %v229 = vsel %vm214, %v212, %v228
        %v231 = vunpack.c.l.s4 1983009808
        %v232 = vunpack.c.0.s8 %v231
        %v233 = vperm.slane %v227, %v232
        %v235 = vunpack.c.l.s4 1983009808
        %v236 = vunpack.c.0.s8 %v235
        %v237 = vperm.slane %v229, %v236
        %v238 = vrot.slane %v233, 4
        %v239 = vsel %vm214, %v238, %v221
        %v240 = vrot.slane %v221, 4
        %v241 = vsel %vm214, %v233, %v240
        %v243 = vunpack.c.l.s4 1934713408
        %v244 = vunpack.c.0.s8 %v243
        %v245 = vperm.slane %v239, %v244
        %v247 = vunpack.c.l.s4 1934713408
        %v248 = vunpack.c.0.s8 %v247
        %v249 = vperm.slane %v241, %v248
        %v250 = vrot.slane %v237, 4
        %v251 = vsel %vm214, %v250, %v225
        %v252 = vrot.slane %v225, 4
        %v253 = vsel %vm214, %v237, %v252
        %v255 = vunpack.c.l.s4 1934713408
        %v256 = vunpack.c.0.s8 %v255
        %v257 = vperm.slane %v251, %v256
        %v259 = vunpack.c.l.s4 1934713408
        %v260 = vunpack.c.0.s8 %v259
        %v261 = vperm.slane %v253, %v260
        %v262 = vrot.slane %v245, 4
        %v263 = vsel %vm214, 0.0, %v262
        %v264 = vrot.slane %v249, 4
        %v265 = vsel %vm214, 0.0, %v264
        %v266 = vrot.slane %v257, 4
        %v267 = vsel %vm214, 0.0, %v266
        %v268 = vrot.slane %v261, 4
        %v269 = vsel %vm214, 0.0, %v268
        %271 = vrot.lane.b32.xlu0 %v263, 16
        %v272 = vpop.permute.xlu0 %271
        %275 = vrot.lane.b32.xlu0 %v249, 32
        %v276 = vpop.permute.xlu0 %275
        %279 = vrot.lane.b32.xlu0 %v265, 48
        %v280 = vpop.permute.xlu0 %279
        %283 = vrot.lane.b32.xlu0 %v257, 64
        %v284 = vpop.permute.xlu0 %283
        %287 = vrot.lane.b32.xlu0 %v267, 80
        %v288 = vpop.permute.xlu0 %287
        %291 = vrot.lane.b32.xlu0 %v261, 96
        %v292 = vpop.permute.xlu0 %291
        %295 = vrot.lane.b32.xlu0 %v269, 112
        %v296 = vpop.permute.xlu0 %295
        %vm298 = vcmask 130048
        %v299 = vsel %vm298, %v245, %v272
        %vm300 = vcmask 261120
        %v301 = vsel %vm300, %v299, %v276
        %vm302 = vcmask 392192
        %v303 = vsel %vm302, %v301, %v280
        %vm304 = vcmask 523264
        %v305 = vsel %vm304, %v303, %v284
        %vm306 = vcmask 654336
        %v307 = vsel %vm306, %v305, %v288
        %vm308 = vcmask 785408
        %v309 = vsel %vm308, %v307, %v292
        %vm310 = vcmask 916480
        %v311 = vsel %vm310, %v309, %v296
        %v312 = vld [vmem:[%s1] sm:$0xff]
        %vm313 = vcmask 31744
        %v315 = vsel %vm313, %v312, 0
        %vm317 = vcmask 1043456
        %v319 = vsel %vm317, %v311, 0
        %321 = vmatpush.msra.mxu0 0.0
        %322 = vmatpush.msra.mxu0 0.0
        %323 = vmatpush.msra.mxu0 0.0
        %324 = vmatpush.msra.mxu0 0.0
        %325 = vmatpush.msra.mxu0 0.0
        %326 = vmatpush.msra.mxu0 0.0
        %327 = vmatpush.msra.mxu0 0.0
        %328 = vmatpush.msra.mxu0 0.0
        %329 = vmatpush.msra.mxu0 0.0
        %330 = vmatpush.msra.mxu0 0.0
        %331 = vmatpush.msra.mxu0 0.0
        %332 = vmatpush.msra.mxu0 0.0
        %333 = vmatpush.msra.mxu0 0.0
        %334 = vmatpush.msra.mxu0 0.0
        %335 = vmatpush.msra.mxu0 0.0
        %336 = vmatpush.msra.mxu0 %v319
        %337 = vmatmul.f32.gmra.mxu0 %v315
        %v338 = vpop.f32.mrf.mxu0
        %v339 = vadd.f32 0.0, %v338
        %340 = vdwg.mxu0
        %342 = vrot.lane.b32.xlu0 %v339, 112
        %v343 = vpop.permute.xlu0 %342
        %345 = vrot.lane.b32.xlu0 %v339, 96
        %v346 = vpop.permute.xlu0 %345
        %348 = vrot.lane.b32.xlu0 %v339, 80
        %v349 = vpop.permute.xlu0 %348
        %351 = vrot.lane.b32.xlu0 %v339, 64
        %v352 = vpop.permute.xlu0 %351
        %354 = vrot.lane.b32.xlu0 %v339, 48
        %v355 = vpop.permute.xlu0 %354
        %357 = vrot.lane.b32.xlu0 %v339, 32
        %v358 = vpop.permute.xlu0 %357
        %360 = vrot.lane.b32.xlu0 %v339, 16
        %v361 = vpop.permute.xlu0 %360
        %v363 = vrot.slane %v346, 4
        %v364 = vsel %vm214, %v363, %v339
        %v366 = vunpack.c.l.s4 1983009808
        %v367 = vunpack.c.0.s8 %v366
        %v368 = vperm.slane %v364, %v367
        %v369 = vrot.slane %v349, 4
        %v370 = vsel %vm214, %v369, %v343
        %v372 = vunpack.c.l.s4 1983009808
        %v373 = vunpack.c.0.s8 %v372
        %v374 = vperm.slane %v370, %v373
        %v375 = vrot.slane %v358, 4
        %v376 = vsel %vm214, %v375, %v352
        %v378 = vunpack.c.l.s4 1983009808
        %v379 = vunpack.c.0.s8 %v378
        %v380 = vperm.slane %v376, %v379
        %v381 = vrot.slane %v361, 4
        %v382 = vsel %vm214, %v381, %v355
        %v384 = vunpack.c.l.s4 1983009808
        %v385 = vunpack.c.0.s8 %v384
        %v386 = vperm.slane %v382, %v385
        %v387 = vrot.slane %v374, 4
        %v388 = vsel %vm214, %v387, %v368
        %v389 = vrot.slane %v368, 4
        %v390 = vsel %vm214, %v374, %v389
        %v392 = vunpack.c.l.s4 1934713408
        %v393 = vunpack.c.0.s8 %v392
        %v394 = vperm.slane %v388, %v393
        %v396 = vunpack.c.l.s4 1934713408
        %v397 = vunpack.c.0.s8 %v396
        %v398 = vperm.slane %v390, %v397
        %v399 = vrot.slane %v386, 4
        %v400 = vsel %vm214, %v399, %v380
        %v401 = vrot.slane %v380, 4
        %v402 = vsel %vm214, %v386, %v401
        %v404 = vunpack.c.l.s4 1934713408
        %v405 = vunpack.c.0.s8 %v404
        %v406 = vperm.slane %v400, %v405
        %v408 = vunpack.c.l.s4 1934713408
        %v409 = vunpack.c.0.s8 %v408
        %v410 = vperm.slane %v402, %v409
        %v411 = vrot.slane %v406, 4
        %v412 = vsel %vm214, %v411, %v394
        %v413 = vrot.slane %v394, 4
        %v414 = vsel %vm214, %v406, %v413
        %v415 = vrot.slane %v410, 4
        %v416 = vsel %vm214, %v415, %v398
        %v417 = vrot.slane %v398, 4
        %v418 = vsel %vm214, %v410, %v417
        %v419 = vrot.slane %v339, 4
        %v420 = vrot.slane %v343, 4
        %v421 = vrot.slane %v346, 4
        %v422 = vrot.slane %v349, 4
        %v423 = vrot.slane %v352, 4
        %v424 = vrot.slane %v355, 4
        %v425 = vrot.slane %v358, 4
        %v426 = vrot.slane %v361, 4
        %v435 = vrot.slane %v421, 4
        %v436 = vsel %vm214, %v435, %v419
        %v438 = vunpack.c.l.s4 1983009808
        %v439 = vunpack.c.0.s8 %v438
        %v440 = vperm.slane %v436, %v439
        %v441 = vrot.slane %v422, 4
        %v442 = vsel %vm214, %v441, %v420
        %v444 = vunpack.c.l.s4 1983009808
        %v445 = vunpack.c.0.s8 %v444
        %v446 = vperm.slane %v442, %v445
        %v447 = vrot.slane %v425, 4
        %v448 = vsel %vm214, %v447, %v423
        %v450 = vunpack.c.l.s4 1983009808
        %v451 = vunpack.c.0.s8 %v450
        %v452 = vperm.slane %v448, %v451
        %v453 = vrot.slane %v426, 4
        %v454 = vsel %vm214, %v453, %v424
        %v456 = vunpack.c.l.s4 1983009808
        %v457 = vunpack.c.0.s8 %v456
        %v458 = vperm.slane %v454, %v457
        %v459 = vrot.slane %v446, 4
        %v460 = vsel %vm214, %v459, %v440
        %v461 = vrot.slane %v440, 4
        %v462 = vsel %vm214, %v446, %v461
        %v464 = vunpack.c.l.s4 1934713408
        %v465 = vunpack.c.0.s8 %v464
        %v466 = vperm.slane %v460, %v465
        %v468 = vunpack.c.l.s4 1934713408
        %v469 = vunpack.c.0.s8 %v468
        %v470 = vperm.slane %v462, %v469
        %v471 = vrot.slane %v458, 4
        %v472 = vsel %vm214, %v471, %v452
        %v473 = vrot.slane %v452, 4
        %v474 = vsel %vm214, %v458, %v473
        %v476 = vunpack.c.l.s4 1934713408
        %v477 = vunpack.c.0.s8 %v476
        %v478 = vperm.slane %v472, %v477
        %v480 = vunpack.c.l.s4 1934713408
        %v481 = vunpack.c.0.s8 %v480
        %v482 = vperm.slane %v474, %v481
        %v483 = vrot.slane %v478, 4
        %v484 = vsel %vm214, %v483, %v466
        %v485 = vrot.slane %v466, 4
        %v486 = vsel %vm214, %v478, %v485
        %v487 = vrot.slane %v482, 4
        %v488 = vsel %vm214, %v487, %v470
        %v489 = vrot.slane %v470, 4
        %v490 = vsel %vm214, %v482, %v489
        %v491 = vsel %vm298, %v484, 0.0
        %v492 = vsel %vm298, %v486, 0.0
        %v493 = vadd.f32 %v491, %v492
        %v494 = vsel %vm298, %v488, 0.0
        %v495 = vadd.f32 %v493, %v494
        %v496 = vsel %vm298, %v490, 0.0
        %v497 = vadd.f32 %v495, %v496
        %v498 = vrcp.pop 4.0
        %v499 = vmul.f32 4.0, %v498
        %v500 = vsub.f32 1.0, %v499
        %v501 = vmul.f32 %v498, %v500
        %v502 = vadd.f32 %v498, %v501
        %vm503 = vweird.f32 %v498
        %v504 = vsel %vm503, %v498, %v502
        %v505 = vmul.f32 %v497, %v504
        %v506 = vsub.f32 %v484, %v505
        %v507 = vsub.f32 %v486, %v505
        %v508 = vsub.f32 %v488, %v505
        %v509 = vsub.f32 %v490, %v505
        %v510 = vmul.f32 %v506, 0.25
        %v511 = vmul.f32 %v507, 0.25
        %v512 = vmul.f32 %v508, 0.25
        %v513 = vmul.f32 %v509, 0.25
        %514 = vrot.lane.b32.xlu0 %v263, 8
        %v515 = vpop.permute.xlu0 %514
        %517 = vrot.lane.b32.xlu0 %v249, 16
        %v518 = vpop.permute.xlu0 %517
        %520 = vrot.lane.b32.xlu0 %v265, 24
        %v521 = vpop.permute.xlu0 %520
        %523 = vrot.lane.b32.xlu0 %v257, 32
        %v524 = vpop.permute.xlu0 %523
        %526 = vrot.lane.b32.xlu0 %v267, 40
        %v527 = vpop.permute.xlu0 %526
        %529 = vrot.lane.b32.xlu0 %v261, 48
        %v530 = vpop.permute.xlu0 %529
        %532 = vrot.lane.b32.xlu0 %v269, 56
        %v533 = vpop.permute.xlu0 %532
        %vm535 = vcmask 64512
        %v536 = vsel %vm535, %v245, %v515
        %v537 = vsel %vm298, %v536, %v518
        %vm538 = vcmask 195584
        %v539 = vsel %vm538, %v537, %v521
        %v540 = vsel %vm300, %v539, %v524
        %vm541 = vcmask 326656
        %v542 = vsel %vm541, %v540, %v527
        %v543 = vsel %vm302, %v542, %v530
        %vm544 = vcmask 457728
        %v545 = vsel %vm544, %v543, %v533
        %550 = vrot.lane.b32.xlu0 %v209, 120
        %v551 = vpop.permute.xlu0 %550
        %552 = vrot.lane.b32.xlu0 %v210, 120
        %v553 = vpop.permute.xlu0 %552
        %554 = vrot.lane.b32.xlu0 %v211, 120
        %v555 = vpop.permute.xlu0 %554
        %556 = vrot.lane.b32.xlu0 %v212, 120
        %v557 = vpop.permute.xlu0 %556
        %v562 = vrot.slane %v555, 4
        %v563 = vsel %vm214, %v562, %v551
        %v564 = vrot.slane %v551, 4
        %v565 = vsel %vm214, %v555, %v564
        %v567 = vunpack.c.l.s4 1983009808
        %v568 = vunpack.c.0.s8 %v567
        %v569 = vperm.slane %v563, %v568
        %v571 = vunpack.c.l.s4 1983009808
        %v572 = vunpack.c.0.s8 %v571
        %v573 = vperm.slane %v565, %v572
        %v574 = vrot.slane %v557, 4
        %v575 = vsel %vm214, %v574, %v553
        %v576 = vrot.slane %v553, 4
        %v577 = vsel %vm214, %v557, %v576
        %v579 = vunpack.c.l.s4 1983009808
        %v580 = vunpack.c.0.s8 %v579
        %v581 = vperm.slane %v575, %v580
        %v583 = vunpack.c.l.s4 1983009808
        %v584 = vunpack.c.0.s8 %v583
        %v585 = vperm.slane %v577, %v584
        %v586 = vrot.slane %v581, 4
        %v587 = vsel %vm214, %v586, %v569
        %v588 = vrot.slane %v569, 4
        %v589 = vsel %vm214, %v581, %v588
        %v591 = vunpack.c.l.s4 1934713408
        %v592 = vunpack.c.0.s8 %v591
        %v593 = vperm.slane %v587, %v592
        %v595 = vunpack.c.l.s4 1934713408
        %v596 = vunpack.c.0.s8 %v595
        %v597 = vperm.slane %v589, %v596
        %v598 = vrot.slane %v585, 4
        %v599 = vsel %vm214, %v598, %v573
        %v600 = vrot.slane %v573, 4
        %v601 = vsel %vm214, %v585, %v600
        %v603 = vunpack.c.l.s4 1934713408
        %v604 = vunpack.c.0.s8 %v603
        %v605 = vperm.slane %v599, %v604
        %v607 = vunpack.c.l.s4 1934713408
        %v608 = vunpack.c.0.s8 %v607
        %v609 = vperm.slane %v601, %v608
        %v610 = vrot.slane %v593, 4
        %v611 = vsel %vm214, 0.0, %v610
        %v612 = vrot.slane %v597, 4
        %v613 = vsel %vm214, 0.0, %v612
        %v614 = vrot.slane %v605, 4
        %v615 = vsel %vm214, 0.0, %v614
        %v616 = vrot.slane %v609, 4
        %v617 = vsel %vm214, 0.0, %v616
        %619 = vrot.lane.b32.xlu0 %v611, 8
        %v620 = vpop.permute.xlu0 %619
        %623 = vrot.lane.b32.xlu0 %v597, 16
        %v624 = vpop.permute.xlu0 %623
        %627 = vrot.lane.b32.xlu0 %v613, 24
        %v628 = vpop.permute.xlu0 %627
        %631 = vrot.lane.b32.xlu0 %v605, 32
        %v632 = vpop.permute.xlu0 %631
        %635 = vrot.lane.b32.xlu0 %v615, 40
        %v636 = vpop.permute.xlu0 %635
        %639 = vrot.lane.b32.xlu0 %v609, 48
        %v640 = vpop.permute.xlu0 %639
        %643 = vrot.lane.b32.xlu0 %v617, 56
        %v644 = vpop.permute.xlu0 %643
        %v646 = vsel %vm535, %v593, %v620
        %v647 = vsel %vm298, %v646, %v624
        %v648 = vsel %vm538, %v647, %v628
        %v649 = vsel %vm300, %v648, %v632
        %v650 = vsel %vm541, %v649, %v636
        %v651 = vsel %vm302, %v650, %v640
        %v652 = vsel %vm544, %v651, %v644
        %v653 = vrot.slane %v416, 4
        %v654 = vsel %vm214, %v653, %v412
        %v655 = vrot.slane %v412, 4
        %v656 = vsel %vm214, %v416, %v655
        %v658 = vunpack.c.l.s4 1983009808
        %v659 = vunpack.c.0.s8 %v658
        %v660 = vperm.slane %v654, %v659
        %v662 = vunpack.c.l.s4 1983009808
        %v663 = vunpack.c.0.s8 %v662
        %v664 = vperm.slane %v656, %v663
        %v665 = vrot.slane %v418, 4
        %v666 = vsel %vm214, %v665, %v414
        %v667 = vrot.slane %v414, 4
        %v668 = vsel %vm214, %v418, %v667
        %v670 = vunpack.c.l.s4 1983009808
        %v671 = vunpack.c.0.s8 %v670
        %v672 = vperm.slane %v666, %v671
        %v674 = vunpack.c.l.s4 1983009808
        %v675 = vunpack.c.0.s8 %v674
        %v676 = vperm.slane %v668, %v675
        %v677 = vrot.slane %v672, 4
        %v678 = vsel %vm214, %v677, %v660
        %v679 = vrot.slane %v660, 4
        %v680 = vsel %vm214, %v672, %v679
        %v682 = vunpack.c.l.s4 1934713408
        %v683 = vunpack.c.0.s8 %v682
        %v684 = vperm.slane %v678, %v683
        %v686 = vunpack.c.l.s4 1934713408
        %v687 = vunpack.c.0.s8 %v686
        %v688 = vperm.slane %v680, %v687
        %v689 = vrot.slane %v676, 4
        %v690 = vsel %vm214, %v689, %v664
        %v691 = vrot.slane %v664, 4
        %v692 = vsel %vm214, %v676, %v691
        %v694 = vunpack.c.l.s4 1934713408
        %v695 = vunpack.c.0.s8 %v694
        %v696 = vperm.slane %v690, %v695
        %v698 = vunpack.c.l.s4 1934713408
        %v699 = vunpack.c.0.s8 %v698
        %v700 = vperm.slane %v692, %v699
        %v701 = vrot.slane %v684, 4
        %v702 = vsel %vm214, 0.0, %v701
        %v703 = vrot.slane %v688, 4
        %v704 = vsel %vm214, 0.0, %v703
        %v705 = vrot.slane %v696, 4
        %v706 = vsel %vm214, 0.0, %v705
        %v707 = vrot.slane %v700, 4
        %v708 = vsel %vm214, 0.0, %v707
        %710 = vrot.lane.b32.xlu0 %v702, 8
        %v711 = vpop.permute.xlu0 %710
        %714 = vrot.lane.b32.xlu0 %v688, 16
        %v715 = vpop.permute.xlu0 %714
        %718 = vrot.lane.b32.xlu0 %v704, 24
        %v719 = vpop.permute.xlu0 %718
        %722 = vrot.lane.b32.xlu0 %v696, 32
        %v723 = vpop.permute.xlu0 %722
        %726 = vrot.lane.b32.xlu0 %v706, 40
        %v727 = vpop.permute.xlu0 %726
        %730 = vrot.lane.b32.xlu0 %v700, 48
        %v731 = vpop.permute.xlu0 %730
        %734 = vrot.lane.b32.xlu0 %v708, 56
        %v735 = vpop.permute.xlu0 %734
        %v737 = vsel %vm535, %v684, %v711
        %v738 = vsel %vm298, %v737, %v715
        %v739 = vsel %vm538, %v738, %v719
        %v740 = vsel %vm300, %v739, %v723
        %v741 = vsel %vm541, %v740, %v727
        %v742 = vsel %vm302, %v741, %v731
        %v743 = vsel %vm544, %v742, %v735
        %748 = vrot.lane.b32.xlu0 %v412, 120
        %v749 = vpop.permute.xlu0 %748
        %750 = vrot.lane.b32.xlu0 %v414, 120
        %v751 = vpop.permute.xlu0 %750
        %752 = vrot.lane.b32.xlu0 %v416, 120
        %v753 = vpop.permute.xlu0 %752
        %754 = vrot.lane.b32.xlu0 %v418, 120
        %v755 = vpop.permute.xlu0 %754
        %v760 = vrot.slane %v753, 4
        %v761 = vsel %vm214, %v760, %v749
        %v762 = vrot.slane %v749, 4
        %v763 = vsel %vm214, %v753, %v762
        %v765 = vunpack.c.l.s4 1983009808
        %v766 = vunpack.c.0.s8 %v765
        %v767 = vperm.slane %v761, %v766
        %v769 = vunpack.c.l.s4 1983009808
        %v770 = vunpack.c.0.s8 %v769
        %v771 = vperm.slane %v763, %v770
        %v772 = vrot.slane %v755, 4
        %v773 = vsel %vm214, %v772, %v751
        %v774 = vrot.slane %v751, 4
        %v775 = vsel %vm214, %v755, %v774
        %v777 = vunpack.c.l.s4 1983009808
        %v778 = vunpack.c.0.s8 %v777
        %v779 = vperm.slane %v773, %v778
        %v781 = vunpack.c.l.s4 1983009808
        %v782 = vunpack.c.0.s8 %v781
        %v783 = vperm.slane %v775, %v782
        %v784 = vrot.slane %v779, 4
        %v785 = vsel %vm214, %v784, %v767
        %v786 = vrot.slane %v767, 4
        %v787 = vsel %vm214, %v779, %v786
        %v789 = vunpack.c.l.s4 1934713408
        %v790 = vunpack.c.0.s8 %v789
        %v791 = vperm.slane %v785, %v790
        %v793 = vunpack.c.l.s4 1934713408
        %v794 = vunpack.c.0.s8 %v793
        %v795 = vperm.slane %v787, %v794
        %v796 = vrot.slane %v783, 4
        %v797 = vsel %vm214, %v796, %v771
        %v798 = vrot.slane %v771, 4
        %v799 = vsel %vm214, %v783, %v798
        %v801 = vunpack.c.l.s4 1934713408
        %v802 = vunpack.c.0.s8 %v801
        %v803 = vperm.slane %v797, %v802
        %v805 = vunpack.c.l.s4 1934713408
        %v806 = vunpack.c.0.s8 %v805
        %v807 = vperm.slane %v799, %v806
        %v808 = vrot.slane %v791, 4
        %v809 = vsel %vm214, 0.0, %v808
        %v810 = vrot.slane %v795, 4
        %v811 = vsel %vm214, 0.0, %v810
        %v812 = vrot.slane %v803, 4
        %v813 = vsel %vm214, 0.0, %v812
        %v814 = vrot.slane %v807, 4
        %v815 = vsel %vm214, 0.0, %v814
        %817 = vrot.lane.b32.xlu0 %v809, 8
        %v818 = vpop.permute.xlu0 %817
        %821 = vrot.lane.b32.xlu0 %v795, 16
        %v822 = vpop.permute.xlu0 %821
        %825 = vrot.lane.b32.xlu0 %v811, 24
        %v826 = vpop.permute.xlu0 %825
        %829 = vrot.lane.b32.xlu0 %v803, 32
        %v830 = vpop.permute.xlu0 %829
        %833 = vrot.lane.b32.xlu0 %v813, 40
        %v834 = vpop.permute.xlu0 %833
        %837 = vrot.lane.b32.xlu0 %v807, 48
        %v838 = vpop.permute.xlu0 %837
        %841 = vrot.lane.b32.xlu0 %v815, 56
        %v842 = vpop.permute.xlu0 %841
        %v844 = vsel %vm535, %v791, %v818
        %v845 = vsel %vm298, %v844, %v822
        %v846 = vsel %vm538, %v845, %v826
        %v847 = vsel %vm300, %v846, %v830
        %v848 = vsel %vm541, %v847, %v834
        %v849 = vsel %vm302, %v848, %v838
        %v850 = vsel %vm544, %v849, %v842
        %v851 = vpack.c.bf16 %v743, %v743
        %v852 = vpack.c.bf16 %v850, %v850
        %v853 = vrot.slane %v488, 4
        %v854 = vsel %vm214, %v853, %v484
        %v855 = vrot.slane %v484, 4
        %v856 = vsel %vm214, %v488, %v855
        %v858 = vunpack.c.l.s4 1983009808
        %v859 = vunpack.c.0.s8 %v858
        %v860 = vperm.slane %v854, %v859
        %v862 = vunpack.c.l.s4 1983009808
        %v863 = vunpack.c.0.s8 %v862
        %v864 = vperm.slane %v856, %v863
        %v865 = vrot.slane %v490, 4
        %v866 = vsel %vm214, %v865, %v486
        %v867 = vrot.slane %v486, 4
        %v868 = vsel %vm214, %v490, %v867
        %v870 = vunpack.c.l.s4 1983009808
        %v871 = vunpack.c.0.s8 %v870
        %v872 = vperm.slane %v866, %v871
        %v874 = vunpack.c.l.s4 1983009808
        %v875 = vunpack.c.0.s8 %v874
        %v876 = vperm.slane %v868, %v875
        %v877 = vrot.slane %v872, 4
        %v878 = vsel %vm214, %v877, %v860
        %v879 = vrot.slane %v860, 4
        %v880 = vsel %vm214, %v872, %v879
        %v882 = vunpack.c.l.s4 1934713408
        %v883 = vunpack.c.0.s8 %v882
        %v884 = vperm.slane %v878, %v883
        %v886 = vunpack.c.l.s4 1934713408
        %v887 = vunpack.c.0.s8 %v886
        %v888 = vperm.slane %v880, %v887
        %v889 = vrot.slane %v876, 4
        %v890 = vsel %vm214, %v889, %v864
        %v891 = vrot.slane %v864, 4
        %v892 = vsel %vm214, %v876, %v891
        %v894 = vunpack.c.l.s4 1934713408
        %v895 = vunpack.c.0.s8 %v894
        %v896 = vperm.slane %v890, %v895
        %v898 = vunpack.c.l.s4 1934713408
        %v899 = vunpack.c.0.s8 %v898
        %v900 = vperm.slane %v892, %v899
        %v901 = vrot.slane %v884, 4
        %v902 = vsel %vm214, 0.0, %v901
        %v903 = vrot.slane %v888, 4
        %v904 = vsel %vm214, 0.0, %v903
        %v905 = vrot.slane %v896, 4
        %v906 = vsel %vm214, 0.0, %v905
        %v907 = vrot.slane %v900, 4
        %v908 = vsel %vm214, 0.0, %v907
        %910 = vrot.lane.b32.xlu0 %v902, 8
        %v911 = vpop.permute.xlu0 %910
        %914 = vrot.lane.b32.xlu0 %v888, 16
        %v915 = vpop.permute.xlu0 %914
        %918 = vrot.lane.b32.xlu0 %v904, 24
        %v919 = vpop.permute.xlu0 %918
        %922 = vrot.lane.b32.xlu0 %v896, 32
        %v923 = vpop.permute.xlu0 %922
        %926 = vrot.lane.b32.xlu0 %v906, 40
        %v927 = vpop.permute.xlu0 %926
        %930 = vrot.lane.b32.xlu0 %v900, 48
        %v931 = vpop.permute.xlu0 %930
        %934 = vrot.lane.b32.xlu0 %v908, 56
        %v935 = vpop.permute.xlu0 %934
        %v937 = vsel %vm535, %v884, %v911
        %v938 = vsel %vm298, %v937, %v915
        %v939 = vsel %vm538, %v938, %v919
        %v940 = vsel %vm300, %v939, %v923
        %v941 = vsel %vm541, %v940, %v927
        %v942 = vsel %vm302, %v941, %v931
        %v943 = vsel %vm544, %v942, %v935
        %948 = vrot.lane.b32.xlu0 %v484, 120
        %v949 = vpop.permute.xlu0 %948
        %950 = vrot.lane.b32.xlu0 %v486, 120
        %v951 = vpop.permute.xlu0 %950
        %952 = vrot.lane.b32.xlu0 %v488, 120
        %v953 = vpop.permute.xlu0 %952
        %954 = vrot.lane.b32.xlu0 %v490, 120
        %v955 = vpop.permute.xlu0 %954
        %v960 = vrot.slane %v953, 4
        %v961 = vsel %vm214, %v960, %v949
        %v962 = vrot.slane %v949, 4
        %v963 = vsel %vm214, %v953, %v962
        %v965 = vunpack.c.l.s4 1983009808
        %v966 = vunpack.c.0.s8 %v965
        %v967 = vperm.slane %v961, %v966
        %v969 = vunpack.c.l.s4 1983009808
        %v970 = vunpack.c.0.s8 %v969
        %v971 = vperm.slane %v963, %v970
        %v972 = vrot.slane %v955, 4
        %v973 = vsel %vm214, %v972, %v951
        %v974 = vrot.slane %v951, 4
        %v975 = vsel %vm214, %v955, %v974
        %v977 = vunpack.c.l.s4 1983009808
        %v978 = vunpack.c.0.s8 %v977
        %v979 = vperm.slane %v973, %v978
        %v981 = vunpack.c.l.s4 1983009808
        %v982 = vunpack.c.0.s8 %v981
        %v983 = vperm.slane %v975, %v982
        %v984 = vrot.slane %v979, 4
        %v985 = vsel %vm214, %v984, %v967
        %v986 = vrot.slane %v967, 4
        %v987 = vsel %vm214, %v979, %v986
        %v989 = vunpack.c.l.s4 1934713408
        %v990 = vunpack.c.0.s8 %v989
        %v991 = vperm.slane %v985, %v990
        %v993 = vunpack.c.l.s4 1934713408
        %v994 = vunpack.c.0.s8 %v993
        %v995 = vperm.slane %v987, %v994
        %v996 = vrot.slane %v983, 4
        %v997 = vsel %vm214, %v996, %v971
        %v998 = vrot.slane %v971, 4
        %v999 = vsel %vm214, %v983, %v998
        %v1001 = vunpack.c.l.s4 1934713408
        %v1002 = vunpack.c.0.s8 %v1001
        %v1003 = vperm.slane %v997, %v1002
        %v1005 = vunpack.c.l.s4 1934713408
        %v1006 = vunpack.c.0.s8 %v1005
        %v1007 = vperm.slane %v999, %v1006
        %v1008 = vrot.slane %v991, 4
        %v1009 = vsel %vm214, 0.0, %v1008
        %v1010 = vrot.slane %v995, 4
        %v1011 = vsel %vm214, 0.0, %v1010
        %v1012 = vrot.slane %v1003, 4
        %v1013 = vsel %vm214, 0.0, %v1012
        %v1014 = vrot.slane %v1007, 4
        %v1015 = vsel %vm214, 0.0, %v1014
        %1017 = vrot.lane.b32.xlu0 %v1009, 8
        %v1018 = vpop.permute.xlu0 %1017
        %1021 = vrot.lane.b32.xlu0 %v995, 16
        %v1022 = vpop.permute.xlu0 %1021
        %1025 = vrot.lane.b32.xlu0 %v1011, 24
        %v1026 = vpop.permute.xlu0 %1025
        %1029 = vrot.lane.b32.xlu0 %v1003, 32
        %v1030 = vpop.permute.xlu0 %1029
        %1033 = vrot.lane.b32.xlu0 %v1013, 40
        %v1034 = vpop.permute.xlu0 %1033
        %1037 = vrot.lane.b32.xlu0 %v1007, 48
        %v1038 = vpop.permute.xlu0 %1037
        %1041 = vrot.lane.b32.xlu0 %v1015, 56
        %v1042 = vpop.permute.xlu0 %1041
        %v1044 = vsel %vm535, %v991, %v1018
        %v1045 = vsel %vm298, %v1044, %v1022
        %v1046 = vsel %vm538, %v1045, %v1026
        %v1047 = vsel %vm300, %v1046, %v1030
        %v1048 = vsel %vm541, %v1047, %v1034
        %v1049 = vsel %vm302, %v1048, %v1038
        %v1050 = vsel %vm544, %v1049, %v1042
        %v1051 = vpack.c.bf16 %v943, %v943
        %v1052 = vpack.c.bf16 %v1050, %v1050
        %v1053 = vrot.slane %v512, 4
        %v1054 = vsel %vm214, %v1053, %v510
        %v1055 = vrot.slane %v510, 4
        %v1056 = vsel %vm214, %v512, %v1055
        %v1058 = vunpack.c.l.s4 1983009808
        %v1059 = vunpack.c.0.s8 %v1058
        %v1060 = vperm.slane %v1054, %v1059
        %v1062 = vunpack.c.l.s4 1983009808
        %v1063 = vunpack.c.0.s8 %v1062
        %v1064 = vperm.slane %v1056, %v1063
        %v1065 = vrot.slane %v513, 4
        %v1066 = vsel %vm214, %v1065, %v511
        %v1067 = vrot.slane %v511, 4
        %v1068 = vsel %vm214, %v513, %v1067
        %v1070 = vunpack.c.l.s4 1983009808
        %v1071 = vunpack.c.0.s8 %v1070
        %v1072 = vperm.slane %v1066, %v1071
        %v1074 = vunpack.c.l.s4 1983009808
        %v1075 = vunpack.c.0.s8 %v1074
        %v1076 = vperm.slane %v1068, %v1075
        %v1077 = vrot.slane %v1072, 4
        %v1078 = vsel %vm214, %v1077, %v1060
        %v1079 = vrot.slane %v1060, 4
        %v1080 = vsel %vm214, %v1072, %v1079
        %v1082 = vunpack.c.l.s4 1934713408
        %v1083 = vunpack.c.0.s8 %v1082
        %v1084 = vperm.slane %v1078, %v1083
        %v1086 = vunpack.c.l.s4 1934713408
        %v1087 = vunpack.c.0.s8 %v1086
        %v1088 = vperm.slane %v1080, %v1087
        %v1089 = vrot.slane %v1076, 4
        %v1090 = vsel %vm214, %v1089, %v1064
        %v1091 = vrot.slane %v1064, 4
        %v1092 = vsel %vm214, %v1076, %v1091
        %v1094 = vunpack.c.l.s4 1934713408
        %v1095 = vunpack.c.0.s8 %v1094
        %v1096 = vperm.slane %v1090, %v1095
        %v1098 = vunpack.c.l.s4 1934713408
        %v1099 = vunpack.c.0.s8 %v1098
        %v1100 = vperm.slane %v1092, %v1099
        %v1101 = vrot.slane %v1084, 4
        %v1102 = vsel %vm214, 0.0, %v1101
        %v1103 = vrot.slane %v1088, 4
        %v1104 = vsel %vm214, 0.0, %v1103
        %v1105 = vrot.slane %v1096, 4
        %v1106 = vsel %vm214, 0.0, %v1105
        %v1107 = vrot.slane %v1100, 4
        %v1108 = vsel %vm214, 0.0, %v1107
        %1110 = vrot.lane.b32.xlu0 %v1102, 8
        %v1111 = vpop.permute.xlu0 %1110
        %1114 = vrot.lane.b32.xlu0 %v1088, 16
        %v1115 = vpop.permute.xlu0 %1114
        %1118 = vrot.lane.b32.xlu0 %v1104, 24
        %v1119 = vpop.permute.xlu0 %1118
        %1122 = vrot.lane.b32.xlu0 %v1096, 32
        %v1123 = vpop.permute.xlu0 %1122
        %1126 = vrot.lane.b32.xlu0 %v1106, 40
        %v1127 = vpop.permute.xlu0 %1126
        %1130 = vrot.lane.b32.xlu0 %v1100, 48
        %v1131 = vpop.permute.xlu0 %1130
        %1134 = vrot.lane.b32.xlu0 %v1108, 56
        %v1135 = vpop.permute.xlu0 %1134
        %v1137 = vsel %vm535, %v1084, %v1111
        %v1138 = vsel %vm298, %v1137, %v1115
        %v1139 = vsel %vm538, %v1138, %v1119
        %v1140 = vsel %vm300, %v1139, %v1123
        %v1141 = vsel %vm541, %v1140, %v1127
        %v1142 = vsel %vm302, %v1141, %v1131
        %v1143 = vsel %vm544, %v1142, %v1135
        %1148 = vrot.lane.b32.xlu0 %v510, 120
        %v1149 = vpop.permute.xlu0 %1148
        %1150 = vrot.lane.b32.xlu0 %v511, 120
        %v1151 = vpop.permute.xlu0 %1150
        %1152 = vrot.lane.b32.xlu0 %v512, 120
        %v1153 = vpop.permute.xlu0 %1152
        %1154 = vrot.lane.b32.xlu0 %v513, 120
        %v1155 = vpop.permute.xlu0 %1154
        %v1160 = vrot.slane %v1153, 4
        %v1161 = vsel %vm214, %v1160, %v1149
        %v1162 = vrot.slane %v1149, 4
        %v1163 = vsel %vm214, %v1153, %v1162
        %v1165 = vunpack.c.l.s4 1983009808
        %v1166 = vunpack.c.0.s8 %v1165
        %v1167 = vperm.slane %v1161, %v1166
        %v1169 = vunpack.c.l.s4 1983009808
        %v1170 = vunpack.c.0.s8 %v1169
        %v1171 = vperm.slane %v1163, %v1170
        %v1172 = vrot.slane %v1155, 4
        %v1173 = vsel %vm214, %v1172, %v1151
        %v1174 = vrot.slane %v1151, 4
        %v1175 = vsel %vm214, %v1155, %v1174
        %v1177 = vunpack.c.l.s4 1983009808
        %v1178 = vunpack.c.0.s8 %v1177
        %v1179 = vperm.slane %v1173, %v1178
        %v1181 = vunpack.c.l.s4 1983009808
        %v1182 = vunpack.c.0.s8 %v1181
        %v1183 = vperm.slane %v1175, %v1182
        %v1184 = vrot.slane %v1179, 4
        %v1185 = vsel %vm214, %v1184, %v1167
        %v1186 = vrot.slane %v1167, 4
        %v1187 = vsel %vm214, %v1179, %v1186
        %v1189 = vunpack.c.l.s4 1934713408
        %v1190 = vunpack.c.0.s8 %v1189
        %v1191 = vperm.slane %v1185, %v1190
        %v1193 = vunpack.c.l.s4 1934713408
        %v1194 = vunpack.c.0.s8 %v1193
        %v1195 = vperm.slane %v1187, %v1194
        %v1196 = vrot.slane %v1183, 4
        %v1197 = vsel %vm214, %v1196, %v1171
        %v1198 = vrot.slane %v1171, 4
        %v1199 = vsel %vm214, %v1183, %v1198
        %v1201 = vunpack.c.l.s4 1934713408
        %v1202 = vunpack.c.0.s8 %v1201
        %v1203 = vperm.slane %v1197, %v1202
        %v1205 = vunpack.c.l.s4 1934713408
        %v1206 = vunpack.c.0.s8 %v1205
        %v1207 = vperm.slane %v1199, %v1206
        %v1208 = vrot.slane %v1191, 4
        %v1209 = vsel %vm214, 0.0, %v1208
        %v1210 = vrot.slane %v1195, 4
        %v1211 = vsel %vm214, 0.0, %v1210
        %v1212 = vrot.slane %v1203, 4
        %v1213 = vsel %vm214, 0.0, %v1212
        %v1214 = vrot.slane %v1207, 4
        %v1215 = vsel %vm214, 0.0, %v1214
        %1217 = vrot.lane.b32.xlu0 %v1209, 8
        %v1218 = vpop.permute.xlu0 %1217
        %1221 = vrot.lane.b32.xlu0 %v1195, 16
        %v1222 = vpop.permute.xlu0 %1221
        %1225 = vrot.lane.b32.xlu0 %v1211, 24
        %v1226 = vpop.permute.xlu0 %1225
        %1229 = vrot.lane.b32.xlu0 %v1203, 32
        %v1230 = vpop.permute.xlu0 %1229
        %1233 = vrot.lane.b32.xlu0 %v1213, 40
        %v1234 = vpop.permute.xlu0 %1233
        %1237 = vrot.lane.b32.xlu0 %v1207, 48
        %v1238 = vpop.permute.xlu0 %1237
        %1241 = vrot.lane.b32.xlu0 %v1215, 56
        %v1242 = vpop.permute.xlu0 %1241
        %v1244 = vsel %vm535, %v1191, %v1218
        %v1245 = vsel %vm298, %v1244, %v1222
        %v1246 = vsel %vm538, %v1245, %v1226
        %v1247 = vsel %vm300, %v1246, %v1230
        %v1248 = vsel %vm541, %v1247, %v1234
        %v1249 = vsel %vm302, %v1248, %v1238
        %v1250 = vsel %vm544, %v1249, %v1242
        %v1251 = vpack.c.bf16 %v1143, %v1143
        %v1252 = vpack.c.bf16 %v1250, %v1250
        %1253 = vxpose.xlu0.c.b16.start [1/8] %v1251, 128
        %1254 = vxpose.xlu0.c.b16.cont [2/8] 0, 128
        %1255 = vxpose.xlu0.c.b16.cont [3/8] 0, 128
        %1256 = vxpose.xlu0.c.b16.cont [4/8] 0, 128
        %1257 = vxpose.xlu0.c.b16.cont [5/8] 0, 128
        %1258 = vxpose.xlu0.c.b16.cont [6/8] 0, 128
        %1259 = vxpose.xlu0.c.b16.cont [7/8] 0, 128
        %1260 = vxpose.xlu0.c.b16.end [8/8] 0, 128
        %v1261 = vpop.trf.xlu0
        %v1262 = vpop.trf.xlu0
        %v1263 = vpop.trf.xlu0
        %v1264 = vpop.trf.xlu0
        %v1265 = vpop.trf.xlu0
        %v1266 = vpop.trf.xlu0
        %v1267 = vpop.trf.xlu0
        %v1268 = vpop.trf.xlu0
        %v1270 = vsel %vm313, %v1261, 0
        %v1273 = vsel %vm313, %v1262, 0
        %v1276 = vsel %vm313, %v1263, 0
        %v1279 = vsel %vm313, %v1264, 0
        %vm1281 = vcmask 1041408
        %v1283 = vsel %vm1281, %v1051, 0
        %1285 = vmatpush.bf16.msra.mxu0 0
        %1286 = vmatpush.bf16.msra.mxu0 0
        %1287 = vmatpush.bf16.msra.mxu0 0
        %1288 = vmatpush.bf16.msra.mxu0 0
        %1289 = vmatpush.bf16.msra.mxu0 0
        %1290 = vmatpush.bf16.msra.mxu0 0
        %1291 = vmatpush.bf16.msra.mxu0 0
        %1292 = vmatpush.bf16.msra.mxu0 %v1283
        %1293 = vmatmul.bf16.gmra.mxu0 %v1270
        %v1294 = vpop.f32.mrf.mxu0
        %v1295 = vadd.f32 0.0, %v1294
        %v1296 = vpop.f32.mrf.mxu0
        %v1297 = vadd.f32 0.0, %v1296
        %1298 = vmatmul.bf16.gmra.mxu0 %v1273
        %v1299 = vpop.f32.mrf.mxu0
        %v1300 = vadd.f32 0.0, %v1299
        %v1301 = vpop.f32.mrf.mxu0
        %v1302 = vadd.f32 0.0, %v1301
        %1303 = vmatmul.bf16.gmra.mxu0 %v1276
        %v1304 = vpop.f32.mrf.mxu0
        %v1305 = vadd.f32 0.0, %v1304
        %v1306 = vpop.f32.mrf.mxu0
        %v1307 = vadd.f32 0.0, %v1306
        %1308 = vmatmul.bf16.gmra.mxu0 %v1279
        %v1309 = vpop.f32.mrf.mxu0
        %v1310 = vadd.f32 0.0, %v1309
        %v1311 = vpop.f32.mrf.mxu0
        %v1312 = vadd.f32 0.0, %v1311
        %1313 = vdwg.mxu0
        %1314 = vxpose.xlu0.c.b16.start [1/8] %v1252, 128
        %1315 = vxpose.xlu0.c.b16.cont [2/8] 0, 128
        %1316 = vxpose.xlu0.c.b16.cont [3/8] 0, 128
        %1317 = vxpose.xlu0.c.b16.cont [4/8] 0, 128
        %1318 = vxpose.xlu0.c.b16.cont [5/8] 0, 128
        %1319 = vxpose.xlu0.c.b16.cont [6/8] 0, 128
        %1320 = vxpose.xlu0.c.b16.cont [7/8] 0, 128
        %1321 = vxpose.xlu0.c.b16.end [8/8] 0, 128
        %v1322 = vpop.trf.xlu0
        %v1323 = vpop.trf.xlu0
        %v1324 = vpop.trf.xlu0
        %v1325 = vpop.trf.xlu0
        %v1326 = vpop.trf.xlu0
        %v1327 = vpop.trf.xlu0
        %v1328 = vpop.trf.xlu0
        %v1329 = vpop.trf.xlu0
        %v1331 = vsel %vm313, %v1322, 0
        %v1334 = vsel %vm313, %v1323, 0
        %v1337 = vsel %vm313, %v1324, 0
        %v1340 = vsel %vm313, %v1325, 0
        %v1343 = vsel %vm1281, %v1052, 0
        %1345 = vmatpush.bf16.msra.mxu0 0
        %1346 = vmatpush.bf16.msra.mxu0 0
        %1347 = vmatpush.bf16.msra.mxu0 0
        %1348 = vmatpush.bf16.msra.mxu0 0
        %1349 = vmatpush.bf16.msra.mxu0 0
        %1350 = vmatpush.bf16.msra.mxu0 0
        %1351 = vmatpush.bf16.msra.mxu0 0
        %1352 = vmatpush.bf16.msra.mxu0 %v1343
        %1353 = vmatmul.bf16.gmra.mxu0 %v1331
        %v1354 = vpop.f32.mrf.mxu0
        %v1355 = vadd.f32 0.0, %v1354
        %v1356 = vpop.f32.mrf.mxu0
        %v1357 = vadd.f32 0.0, %v1356
        %1358 = vmatmul.bf16.gmra.mxu0 %v1334
        %v1359 = vpop.f32.mrf.mxu0
        %v1360 = vadd.f32 0.0, %v1359
        %v1361 = vpop.f32.mrf.mxu0
        %v1362 = vadd.f32 0.0, %v1361
        %1363 = vmatmul.bf16.gmra.mxu0 %v1337
        %v1364 = vpop.f32.mrf.mxu0
        %v1365 = vadd.f32 0.0, %v1364
        %v1366 = vpop.f32.mrf.mxu0
        %v1367 = vadd.f32 0.0, %v1366
        %1368 = vmatmul.bf16.gmra.mxu0 %v1340
        %v1369 = vpop.f32.mrf.mxu0
        %v1370 = vadd.f32 0.0, %v1369
        %v1371 = vpop.f32.mrf.mxu0
        %v1372 = vadd.f32 0.0, %v1371
        %1373 = vdwg.mxu0
        %v1374 = vsel %vm304, %v1295, -inf
        %1375 = vmax.xlane.f32.xlu0 %v1374
        %v1376 = vpop.xlane.xlu0 %1375
        %v1377 = vsel %vm304, %v1297, -inf
        %1378 = vmax.xlane.f32.xlu0 %v1377
        %v1379 = vpop.xlane.xlu0 %1378
        %v1380 = vsel %vm304, %v1300, -inf
        %1381 = vmax.xlane.f32.xlu0 %v1380
        %v1382 = vpop.xlane.xlu0 %1381
        %v1383 = vsel %vm304, %v1302, -inf
        %1384 = vmax.xlane.f32.xlu0 %v1383
        %v1385 = vpop.xlane.xlu0 %1384
        %v1386 = vsel %vm304, %v1305, -inf
        %1387 = vmax.xlane.f32.xlu0 %v1386
        %v1388 = vpop.xlane.xlu0 %1387
        %v1389 = vsel %vm304, %v1307, -inf
        %1390 = vmax.xlane.f32.xlu0 %v1389
        %v1391 = vpop.xlane.xlu0 %1390
        %v1392 = vsel %vm304, %v1310, -inf
        %1393 = vmax.xlane.f32.xlu0 %v1392
        %v1394 = vpop.xlane.xlu0 %1393
        %v1395 = vsel %vm304, %v1312, -inf
        %1396 = vmax.xlane.f32.xlu0 %v1395
        %v1397 = vpop.xlane.xlu0 %1396
        %v1398 = vsel %vm304, %v1355, -inf
        %1399 = vmax.xlane.f32.xlu0 %v1398
        %v1400 = vpop.xlane.xlu0 %1399
        %v1401 = vsel %vm304, %v1357, -inf
        %1402 = vmax.xlane.f32.xlu0 %v1401
        %v1403 = vpop.xlane.xlu0 %1402
        %v1404 = vsel %vm304, %v1360, -inf
        %1405 = vmax.xlane.f32.xlu0 %v1404
        %v1406 = vpop.xlane.xlu0 %1405
        %v1407 = vsel %vm304, %v1362, -inf
        %1408 = vmax.xlane.f32.xlu0 %v1407
        %v1409 = vpop.xlane.xlu0 %1408
        %v1410 = vsel %vm304, %v1365, -inf
        %1411 = vmax.xlane.f32.xlu0 %v1410
        %v1412 = vpop.xlane.xlu0 %1411
        %v1413 = vsel %vm304, %v1367, -inf
        %1414 = vmax.xlane.f32.xlu0 %v1413
        %v1415 = vpop.xlane.xlu0 %1414
        %v1416 = vsel %vm304, %v1370, -inf
        %1417 = vmax.xlane.f32.xlu0 %v1416
        %v1418 = vpop.xlane.xlu0 %1417
        %v1419 = vsel %vm304, %v1372, -inf
        %1420 = vmax.xlane.f32.xlu0 %v1419
        %v1421 = vpop.xlane.xlu0 %1420
        %v1422 = vsub.f32 %v1295, %v1376
        %v1423 = vsub.f32 %v1297, %v1379
        %v1424 = vsub.f32 %v1300, %v1382
        %v1425 = vsub.f32 %v1302, %v1385
        %v1426 = vsub.f32 %v1305, %v1388
        %v1427 = vsub.f32 %v1307, %v1391
        %v1428 = vsub.f32 %v1310, %v1394
        %v1429 = vsub.f32 %v1312, %v1397
        %v1430 = vsub.f32 %v1355, %v1400
        %v1431 = vsub.f32 %v1357, %v1403
        %v1432 = vsub.f32 %v1360, %v1406
        %v1433 = vsub.f32 %v1362, %v1409
        %v1434 = vsub.f32 %v1365, %v1412
        %v1435 = vsub.f32 %v1367, %v1415
        %v1436 = vsub.f32 %v1370, %v1418
        %v1437 = vsub.f32 %v1372, %v1421
        %v1438 = vmul.f32 %v1422, 1.442695
        %v1439 = vpow.pop %v1438
        %v1440 = vmul.f32 %v1423, 1.442695
        %v1441 = vpow.pop %v1440
        %v1442 = vmul.f32 %v1424, 1.442695
        %v1443 = vpow.pop %v1442
        %v1444 = vmul.f32 %v1425, 1.442695
        %v1445 = vpow.pop %v1444
        %v1446 = vmul.f32 %v1426, 1.442695
        %v1447 = vpow.pop %v1446
        %v1448 = vmul.f32 %v1427, 1.442695
        %v1449 = vpow.pop %v1448
        %v1450 = vmul.f32 %v1428, 1.442695
        %v1451 = vpow.pop %v1450
        %v1452 = vmul.f32 %v1429, 1.442695
        %v1453 = vpow.pop %v1452
        %v1454 = vmul.f32 %v1430, 1.442695
        %v1455 = vpow.pop %v1454
        %v1456 = vmul.f32 %v1431, 1.442695
        %v1457 = vpow.pop %v1456
        %v1458 = vmul.f32 %v1432, 1.442695
        %v1459 = vpow.pop %v1458
        %v1460 = vmul.f32 %v1433, 1.442695
        %v1461 = vpow.pop %v1460
        %v1462 = vmul.f32 %v1434, 1.442695
        %v1463 = vpow.pop %v1462
        %v1464 = vmul.f32 %v1435, 1.442695
        %v1465 = vpow.pop %v1464
        %v1466 = vmul.f32 %v1436, 1.442695
        %v1467 = vpow.pop %v1466
        %v1468 = vmul.f32 %v1437, 1.442695
        %v1469 = vpow.pop %v1468
        %v1470 = vsel %vm304, %v1439, 0.0
        %1471 = vadd.xlane.f32.xlu0 %v1470
        %v1472 = vpop.xlane.xlu0 %1471
        %v1473 = vsel %vm304, %v1441, 0.0
        %1474 = vadd.xlane.f32.xlu0 %v1473
        %v1475 = vpop.xlane.xlu0 %1474
        %v1476 = vsel %vm304, %v1443, 0.0
        %1477 = vadd.xlane.f32.xlu0 %v1476
        %v1478 = vpop.xlane.xlu0 %1477
        %v1479 = vsel %vm304, %v1445, 0.0
        %1480 = vadd.xlane.f32.xlu0 %v1479
        %v1481 = vpop.xlane.xlu0 %1480
        %v1482 = vsel %vm304, %v1447, 0.0
        %1483 = vadd.xlane.f32.xlu0 %v1482
        %v1484 = vpop.xlane.xlu0 %1483
        %v1485 = vsel %vm304, %v1449, 0.0
        %1486 = vadd.xlane.f32.xlu0 %v1485
        %v1487 = vpop.xlane.xlu0 %1486
        %v1488 = vsel %vm304, %v1451, 0.0
        %1489 = vadd.xlane.f32.xlu0 %v1488
        %v1490 = vpop.xlane.xlu0 %1489
        %v1491 = vsel %vm304, %v1453, 0.0
        %1492 = vadd.xlane.f32.xlu0 %v1491
        %v1493 = vpop.xlane.xlu0 %1492
        %v1494 = vsel %vm304, %v1455, 0.0
        %1495 = vadd.xlane.f32.xlu0 %v1494
        %v1496 = vpop.xlane.xlu0 %1495
        %v1497 = vsel %vm304, %v1457, 0.0
        %1498 = vadd.xlane.f32.xlu0 %v1497
        %v1499 = vpop.xlane.xlu0 %1498
        %v1500 = vsel %vm304, %v1459, 0.0
        %1501 = vadd.xlane.f32.xlu0 %v1500
        %v1502 = vpop.xlane.xlu0 %1501
        %v1503 = vsel %vm304, %v1461, 0.0
        %1504 = vadd.xlane.f32.xlu0 %v1503
        %v1505 = vpop.xlane.xlu0 %1504
        %v1506 = vsel %vm304, %v1463, 0.0
        %1507 = vadd.xlane.f32.xlu0 %v1506
        %v1508 = vpop.xlane.xlu0 %1507
        %v1509 = vsel %vm304, %v1465, 0.0
        %1510 = vadd.xlane.f32.xlu0 %v1509
        %v1511 = vpop.xlane.xlu0 %1510
        %v1512 = vsel %vm304, %v1467, 0.0
        %1513 = vadd.xlane.f32.xlu0 %v1512
        %v1514 = vpop.xlane.xlu0 %1513
        %v1515 = vsel %vm304, %v1469, 0.0
        %1516 = vadd.xlane.f32.xlu0 %v1515
        %v1517 = vpop.xlane.xlu0 %1516
        %v1518 = vpack.c.bf16 %v1439, %v1439
        %v1519 = vpack.c.bf16 %v1441, %v1441
        %v1520 = vpack.c.bf16 %v1443, %v1443
        %v1521 = vpack.c.bf16 %v1445, %v1445
        %v1522 = vpack.c.bf16 %v1447, %v1447
        %v1523 = vpack.c.bf16 %v1449, %v1449
        %v1524 = vpack.c.bf16 %v1451, %v1451
        %v1525 = vpack.c.bf16 %v1453, %v1453
        %v1526 = vpack.c.bf16 %v1455, %v1455
        %v1527 = vpack.c.bf16 %v1457, %v1457
        %v1528 = vpack.c.bf16 %v1459, %v1459
        %v1529 = vpack.c.bf16 %v1461, %v1461
        %v1530 = vpack.c.bf16 %v1463, %v1463
        %v1531 = vpack.c.bf16 %v1465, %v1465
        %v1532 = vpack.c.bf16 %v1467, %v1467
        %v1533 = vpack.c.bf16 %v1469, %v1469
        %v1542 = vunpack.c.l.b16 %v1518
        %v1543 = vunpack.c.l.b16 %v1519
        %v1544 = vunpack.c.l.b16 %v1520
        %v1545 = vunpack.c.l.b16 %v1521
        %v1546 = vunpack.c.l.b16 %v1522
        %v1547 = vunpack.c.l.b16 %v1523
        %v1548 = vunpack.c.l.b16 %v1524
        %v1549 = vunpack.c.l.b16 %v1525
        %v1550 = vpack.c.b16 %v1543, %v1542
        %v1551 = vpack.c.b16 %v1545, %v1544
        %v1552 = vpack.c.b16 %v1547, %v1546
        %v1553 = vpack.c.b16 %v1549, %v1548
        %v1555 = vsel %vm304, %v851, 0
        %v1558 = vsel %vm304, %v1550, 0
        %v1561 = vsel %vm304, %v1551, 0
        %v1564 = vsel %vm304, %v1552, 0
        %v1567 = vsel %vm304, %v1553, 0
        %1569 = vmatpush.bf16.xpose.msra.mxu0 0
        %1570 = vmatpush.bf16.xpose.msra.mxu0 0
        %1571 = vmatpush.bf16.xpose.msra.mxu0 0
        %1572 = vmatpush.bf16.xpose.msra.mxu0 0
        %1573 = vmatpush.bf16.xpose.msra.mxu0 %v1567
        %1574 = vmatpush.bf16.xpose.msra.mxu0 %v1564
        %1575 = vmatpush.bf16.xpose.msra.mxu0 %v1561
        %1576 = vmatpush.bf16.xpose.msra.mxu0 %v1558
        %1577 = vmatmul.bf16.gmra.mxu0 %v1555
        %v1578 = vpop.f32.mrf.mxu0
        %v1579 = vadd.f32 0.0, %v1578
        %v1580 = vpop.f32.mrf.mxu0
        %1581 = vdwg.mxu0
        %v1590 = vunpack.c.l.b16 %v1526
        %v1591 = vunpack.c.l.b16 %v1527
        %v1592 = vunpack.c.l.b16 %v1528
        %v1593 = vunpack.c.l.b16 %v1529
        %v1594 = vunpack.c.l.b16 %v1530
        %v1595 = vunpack.c.l.b16 %v1531
        %v1596 = vunpack.c.l.b16 %v1532
        %v1597 = vunpack.c.l.b16 %v1533
        %v1598 = vpack.c.b16 %v1591, %v1590
        %v1599 = vpack.c.b16 %v1593, %v1592
        %v1600 = vpack.c.b16 %v1595, %v1594
        %v1601 = vpack.c.b16 %v1597, %v1596
        %v1603 = vsel %vm304, %v852, 0
        %v1606 = vsel %vm304, %v1598, 0
        %v1609 = vsel %vm304, %v1599, 0
        %v1612 = vsel %vm304, %v1600, 0
        %v1615 = vsel %vm304, %v1601, 0
        %1617 = vmatpush.bf16.xpose.msra.mxu0 0
        %1618 = vmatpush.bf16.xpose.msra.mxu0 0
        %1619 = vmatpush.bf16.xpose.msra.mxu0 0
        %1620 = vmatpush.bf16.xpose.msra.mxu0 0
        %1621 = vmatpush.bf16.xpose.msra.mxu0 %v1615
        %1622 = vmatpush.bf16.xpose.msra.mxu0 %v1612
        %1623 = vmatpush.bf16.xpose.msra.mxu0 %v1609
        %1624 = vmatpush.bf16.xpose.msra.mxu0 %v1606
        %1625 = vmatmul.bf16.gmra.mxu0 %v1603
        %v1626 = vpop.f32.mrf.mxu0
        %v1627 = vadd.f32 0.0, %v1626
        %v1628 = vpop.f32.mrf.mxu0
        %1629 = vdwg.mxu0
        %v1630 = vrcp.pop %v1472
        %v1631 = vrcp.pop %v1475
        %v1632 = vrcp.pop %v1478
        %v1633 = vrcp.pop %v1481
        %v1634 = vrcp.pop %v1484
        %v1635 = vrcp.pop %v1487
        %v1636 = vrcp.pop %v1490
        %v1637 = vrcp.pop %v1493
        %v1638 = vrcp.pop %v1496
        %v1639 = vrcp.pop %v1499
        %v1640 = vrcp.pop %v1502
        %v1641 = vrcp.pop %v1505
        %v1642 = vrcp.pop %v1508
        %v1643 = vrcp.pop %v1511
        %v1644 = vrcp.pop %v1514
        %v1645 = vrcp.pop %v1517
        %v1662 = vlaneseq
        %v1663 = vand.u32 %v1662, 127
        %v1664 = vperm.slane %v1630, %v1663
        %v1665 = vadd.s32 %v1663, 4294967288
        %v1666 = vperm.slane %v1631, %v1665
        %vm1667 = vcmask 130112
        %v1668 = vsel %vm1667, %v1666, %v1664
        %v1669 = vadd.s32 %v1663, 4294967280
        %v1670 = vperm.slane %v1632, %v1669
        %vm1671 = vcmask 195712
        %v1672 = vsel %vm1671, %v1670, %v1668
        %v1673 = vadd.s32 %v1663, 4294967272
        %v1674 = vperm.slane %v1633, %v1673
        %vm1675 = vcmask 261312
        %v1676 = vsel %vm1675, %v1674, %v1672
        %v1677 = vadd.s32 %v1663, 4294967264
        %v1678 = vperm.slane %v1634, %v1677
        %vm1679 = vcmask 326912
        %v1680 = vsel %vm1679, %v1678, %v1676
        %v1681 = vadd.s32 %v1663, 4294967256
        %v1682 = vperm.slane %v1635, %v1681
        %vm1683 = vcmask 392512
        %v1684 = vsel %vm1683, %v1682, %v1680
        %v1685 = vadd.s32 %v1663, 4294967248
        %v1686 = vperm.slane %v1636, %v1685
        %vm1687 = vcmask 458112
        %v1688 = vsel %vm1687, %v1686, %v1684
        %v1689 = vadd.s32 %v1663, 4294967240
        %v1690 = vperm.slane %v1637, %v1689
        %vm1691 = vcmask 523712
        %v1692 = vsel %vm1691, %v1690, %v1688
        %v1693 = vperm.slane %v1638, %v1663
        %v1694 = vperm.slane %v1639, %v1665
        %v1695 = vsel %vm1667, %v1694, %v1693
        %v1696 = vperm.slane %v1640, %v1669
        %v1697 = vsel %vm1671, %v1696, %v1695
        %v1698 = vperm.slane %v1641, %v1673
        %v1699 = vsel %vm1675, %v1698, %v1697
        %v1700 = vperm.slane %v1642, %v1677
        %v1701 = vsel %vm1679, %v1700, %v1699
        %v1702 = vperm.slane %v1643, %v1681
        %v1703 = vsel %vm1683, %v1702, %v1701
        %v1704 = vperm.slane %v1644, %v1685
        %v1705 = vsel %vm1687, %v1704, %v1703
        %v1706 = vperm.slane %v1645, %v1689
        %v1707 = vsel %vm1691, %v1706, %v1705
        %vm1708 = vcmask 1042434
        %v1709 = vsel %vm1708, %v1692, %v1692
        %vm1710 = vcmask 1043459
        %v1711 = vsel %vm1710, %v1692, %v1709
        %v1712 = vsel %vm1708, %v1707, %v1707
        %v1713 = vsel %vm1710, %v1707, %v1712
        %v1716 = vmul.f32 %v1579, %v1711
        %v1717 = vmul.f32 %v1627, %v1713
        %v1718 = vld [vmem:[%s2] sm:$0xf]
        %v1720 = vsel %vm313, %v1718, 0
        %v1723 = vsel %vm317, %v1716, 0
        %1725 = vmatpush.msra.mxu0 0.0
        %1726 = vmatpush.msra.mxu0 0.0
        %1727 = vmatpush.msra.mxu0 0.0
        %1728 = vmatpush.msra.mxu0 0.0
        %1729 = vmatpush.msra.mxu0 0.0
        %1730 = vmatpush.msra.mxu0 0.0
        %1731 = vmatpush.msra.mxu0 0.0
        %1732 = vmatpush.msra.mxu0 0.0
        %1733 = vmatpush.msra.mxu0 0.0
        %1734 = vmatpush.msra.mxu0 0.0
        %1735 = vmatpush.msra.mxu0 0.0
        %1736 = vmatpush.msra.mxu0 0.0
        %1737 = vmatpush.msra.mxu0 0.0
        %1738 = vmatpush.msra.mxu0 0.0
        %1739 = vmatpush.msra.mxu0 0.0
        %1740 = vmatpush.msra.mxu0 %v1723
        %1741 = vmatmul.f32.gmra.mxu0 %v1720
        %v1742 = vpop.f32.mrf.mxu0
        %v1743 = vadd.f32 %v545, %v1742
        %1744 = vdwg.mxu0
        %1746 = vrot.lane.b32.xlu0 %v1743, 120
        %v1747 = vpop.permute.xlu0 %1746
        %1749 = vrot.lane.b32.xlu0 %v1743, 112
        %v1750 = vpop.permute.xlu0 %1749
        %1752 = vrot.lane.b32.xlu0 %v1743, 104
        %v1753 = vpop.permute.xlu0 %1752
        %1755 = vrot.lane.b32.xlu0 %v1743, 96
        %v1756 = vpop.permute.xlu0 %1755
        %1758 = vrot.lane.b32.xlu0 %v1743, 88
        %v1759 = vpop.permute.xlu0 %1758
        %1761 = vrot.lane.b32.xlu0 %v1743, 80
        %v1762 = vpop.permute.xlu0 %1761
        %1764 = vrot.lane.b32.xlu0 %v1743, 72
        %v1765 = vpop.permute.xlu0 %1764
        %v1767 = vrot.slane %v1750, 4
        %v1768 = vsel %vm214, %v1767, %v1743
        %v1770 = vunpack.c.l.s4 1983009808
        %v1771 = vunpack.c.0.s8 %v1770
        %v1772 = vperm.slane %v1768, %v1771
        %v1773 = vrot.slane %v1753, 4
        %v1774 = vsel %vm214, %v1773, %v1747
        %v1776 = vunpack.c.l.s4 1983009808
        %v1777 = vunpack.c.0.s8 %v1776
        %v1778 = vperm.slane %v1774, %v1777
        %v1779 = vrot.slane %v1762, 4
        %v1780 = vsel %vm214, %v1779, %v1756
        %v1782 = vunpack.c.l.s4 1983009808
        %v1783 = vunpack.c.0.s8 %v1782
        %v1784 = vperm.slane %v1780, %v1783
        %v1785 = vrot.slane %v1765, 4
        %v1786 = vsel %vm214, %v1785, %v1759
        %v1788 = vunpack.c.l.s4 1983009808
        %v1789 = vunpack.c.0.s8 %v1788
        %v1790 = vperm.slane %v1786, %v1789
        %v1791 = vrot.slane %v1778, 4
        %v1792 = vsel %vm214, %v1791, %v1772
        %v1793 = vrot.slane %v1772, 4
        %v1794 = vsel %vm214, %v1778, %v1793
        %v1796 = vunpack.c.l.s4 1934713408
        %v1797 = vunpack.c.0.s8 %v1796
        %v1798 = vperm.slane %v1792, %v1797
        %v1800 = vunpack.c.l.s4 1934713408
        %v1801 = vunpack.c.0.s8 %v1800
        %v1802 = vperm.slane %v1794, %v1801
        %v1803 = vrot.slane %v1790, 4
        %v1804 = vsel %vm214, %v1803, %v1784
        %v1805 = vrot.slane %v1784, 4
        %v1806 = vsel %vm214, %v1790, %v1805
        %v1808 = vunpack.c.l.s4 1934713408
        %v1809 = vunpack.c.0.s8 %v1808
        %v1810 = vperm.slane %v1804, %v1809
        %v1812 = vunpack.c.l.s4 1934713408
        %v1813 = vunpack.c.0.s8 %v1812
        %v1814 = vperm.slane %v1806, %v1813
        %v1815 = vrot.slane %v1810, 4
        %v1816 = vsel %vm214, %v1815, %v1798
        %v1817 = vrot.slane %v1798, 4
        %v1818 = vsel %vm214, %v1810, %v1817
        %v1819 = vrot.slane %v1814, 4
        %v1820 = vsel %vm214, %v1819, %v1802
        %v1821 = vrot.slane %v1802, 4
        %v1822 = vsel %vm214, %v1814, %v1821
        %v1824 = vsel %vm317, %v1717, 0
        %1826 = vmatpush.msra.mxu0 0.0
        %1827 = vmatpush.msra.mxu0 0.0
        %1828 = vmatpush.msra.mxu0 0.0
        %1829 = vmatpush.msra.mxu0 0.0
        %1830 = vmatpush.msra.mxu0 0.0
        %1831 = vmatpush.msra.mxu0 0.0
        %1832 = vmatpush.msra.mxu0 0.0
        %1833 = vmatpush.msra.mxu0 0.0
        %1834 = vmatpush.msra.mxu0 0.0
        %1835 = vmatpush.msra.mxu0 0.0
        %1836 = vmatpush.msra.mxu0 0.0
        %1837 = vmatpush.msra.mxu0 0.0
        %1838 = vmatpush.msra.mxu0 0.0
        %1839 = vmatpush.msra.mxu0 0.0
        %1840 = vmatpush.msra.mxu0 0.0
        %1841 = vmatpush.msra.mxu0 %v1824
        %1842 = vmatmul.f32.gmra.mxu0 %v1720
        %v1843 = vpop.f32.mrf.mxu0
        %v1844 = vadd.f32 %v652, %v1843
        %1845 = vdwg.mxu0
        %1847 = vrot.lane.b32.xlu0 %v1844, 120
        %v1848 = vpop.permute.xlu0 %1847
        %1850 = vrot.lane.b32.xlu0 %v1844, 112
        %v1851 = vpop.permute.xlu0 %1850
        %1853 = vrot.lane.b32.xlu0 %v1844, 104
        %v1854 = vpop.permute.xlu0 %1853
        %1856 = vrot.lane.b32.xlu0 %v1844, 96
        %v1857 = vpop.permute.xlu0 %1856
        %1859 = vrot.lane.b32.xlu0 %v1844, 88
        %v1860 = vpop.permute.xlu0 %1859
        %1862 = vrot.lane.b32.xlu0 %v1844, 80
        %v1863 = vpop.permute.xlu0 %1862
        %1865 = vrot.lane.b32.xlu0 %v1844, 72
        %v1866 = vpop.permute.xlu0 %1865
        %v1868 = vrot.slane %v1851, 4
        %v1869 = vsel %vm214, %v1868, %v1844
        %v1871 = vunpack.c.l.s4 1983009808
        %v1872 = vunpack.c.0.s8 %v1871
        %v1873 = vperm.slane %v1869, %v1872
        %v1874 = vrot.slane %v1854, 4
        %v1875 = vsel %vm214, %v1874, %v1848
        %v1877 = vunpack.c.l.s4 1983009808
        %v1878 = vunpack.c.0.s8 %v1877
        %v1879 = vperm.slane %v1875, %v1878
        %v1880 = vrot.slane %v1863, 4
        %v1881 = vsel %vm214, %v1880, %v1857
        %v1883 = vunpack.c.l.s4 1983009808
        %v1884 = vunpack.c.0.s8 %v1883
        %v1885 = vperm.slane %v1881, %v1884
        %v1886 = vrot.slane %v1866, 4
        %v1887 = vsel %vm214, %v1886, %v1860
        %v1889 = vunpack.c.l.s4 1983009808
        %v1890 = vunpack.c.0.s8 %v1889
        %v1891 = vperm.slane %v1887, %v1890
        %v1892 = vrot.slane %v1879, 4
        %v1893 = vsel %vm214, %v1892, %v1873
        %v1894 = vrot.slane %v1873, 4
        %v1895 = vsel %vm214, %v1879, %v1894
        %v1897 = vunpack.c.l.s4 1934713408
        %v1898 = vunpack.c.0.s8 %v1897
        %v1899 = vperm.slane %v1893, %v1898
        %v1901 = vunpack.c.l.s4 1934713408
        %v1902 = vunpack.c.0.s8 %v1901
        %v1903 = vperm.slane %v1895, %v1902
        %v1904 = vrot.slane %v1891, 4
        %v1905 = vsel %vm214, %v1904, %v1885
        %v1906 = vrot.slane %v1885, 4
        %v1907 = vsel %vm214, %v1891, %v1906
        %v1909 = vunpack.c.l.s4 1934713408
        %v1910 = vunpack.c.0.s8 %v1909
        %v1911 = vperm.slane %v1905, %v1910
        %v1913 = vunpack.c.l.s4 1934713408
        %v1914 = vunpack.c.0.s8 %v1913
        %v1915 = vperm.slane %v1907, %v1914
        %v1916 = vrot.slane %v1911, 4
        %v1917 = vsel %vm214, %v1916, %v1899
        %v1918 = vrot.slane %v1899, 4
        %v1919 = vsel %vm214, %v1911, %v1918
        %v1920 = vrot.slane %v1915, 4
        %v1921 = vsel %vm214, %v1920, %v1903
        %v1922 = vrot.slane %v1903, 4
        %v1923 = vsel %vm214, %v1915, %v1922
        %1928 = vrot.lane.b32.xlu0 %v1917, 8
        %v1929 = vpop.permute.xlu0 %1928
        %1930 = vrot.lane.b32.xlu0 %v1919, 8
        %v1931 = vpop.permute.xlu0 %1930
        %1932 = vrot.lane.b32.xlu0 %v1921, 8
        %v1933 = vpop.permute.xlu0 %1932
        %1934 = vrot.lane.b32.xlu0 %v1923, 8
        %v1935 = vpop.permute.xlu0 %1934
        %v1940 = vsel %vm535, %v1816, %v1929
        %v1941 = vsel %vm535, %v1818, %v1931
        %v1942 = vsel %vm535, %v1820, %v1933
        %v1943 = vsel %vm535, %v1822, %v1935
        %1944 = vst.msk [vmem:[%s207] sm:$0xff] %vm298, %v1940
        %1945 = vst.msk [vmem:[%s207 + $0x8] sm:$0xff] %vm298, %v1941
        %1946 = vst.msk [vmem:[%s207 + $0x10] sm:$0xff] %vm298, %v1942
        %1947 = vst.msk [vmem:[%s207 + $0x18] sm:$0xff] %vm298, %v1943
        %s1948 = sand.u32 %s112, 1
        %s1949 = scalar_lea.sflag [#allocation4], %s1948
        %s1950 = sand.u32 %s112, 1
        %s1951 = smul.addr %s1950, 32
        %s1952 = scalar_lea.vmem [#allocation5], %s1951
        // Predicated region
        $region37: #{psnl_forward.1} parent=31 // pred_check
          %p1953 = pneg %p122
        $region38: #{psnl_forward.1} parent=31 // pred_check_branch
          %1955 = sbr.rel (%p1953) target = $region40
        $region39: #{psnl_forward.1} parent=31 // pred_region
          %1957 = vsyncadd %s1949, 0
          %s1958 = smul.addr %s24, 8
          %s1959 = sadd.s32 %s25, %s1958
          %s1960 = smul.addr %s1959, 8
          %s1961 = scalar_lea.hbm %s3, %s1960
          %s1962 = sshll.u32 %s1952, 4
          %s1963 = int_to_ptr.vmem [resolvable:$true] %s1962
          %s1964 = sshll.u32 %s1961, 4
          %s1965 = int_to_ptr.hbm [resolvable:$true] %s1964
          %1970 = dma.vmem_to_hbm [thread:$0]  %s1963, 512, %s1965, %s1949, 128, 256, 8
        $region40: #{psnl_forward.1} parent=31 // pred_fallthru
          _
      $region32: #{psnl_forward.1} parent=5 // pred_fallthru
        _
      %p1971 = scmp.le.s32.totalorder 2, %s15
      // Predicated region
      $region41: #{psnl_forward.1} parent=5 // pred_check
        %p1972 = pneg %p1971
      $region42: #{psnl_forward.1} parent=5 // pred_check_branch
        %1974 = sbr.rel (%p1972) target = $region44
      $region43: #{psnl_forward.1} parent=5 // pred_region
        %s1975 = ssub.s32 %s15, 2
        // Predicated region
        $region45: #{psnl_forward.1} parent=43 // pred_check
          %p1976 = pneg %p128
        $region46: #{psnl_forward.1} parent=43 // pred_check_branch
          %1978 = sbr.rel (%p1976) target = $region48
        $region47: #{psnl_forward.1} parent=43 // pred_region
          %s1979 = sand.u32 %s113, 1
          %s1980 = scalar_lea.sflag [#allocation4], %s1979
          %s1981 = sand.u32 %s113, 1
          %s1982 = smul.addr %s1981, 32
          %s1983 = scalar_lea.vmem [#allocation5], %s1982
          %1985 = dma.done %s1980, 512
        $region48: #{psnl_forward.1} parent=43 // pred_fallthru
          _
      $region44: #{psnl_forward.1} parent=5 // pred_fallthru
        _
    $region6: #{psnl_forward.1} parent=1 // loop_footer
      %s19 = sadd.s32 1, %s15
    $region7: #{psnl_forward.1} parent=1 // loop_footer_branch
      %14 = sbr.rel target = $region3
    $region8: #{psnl_forward.1} parent=1 // loop_exit
      _
    %1986 = vsyncpa [#allocation3], 1
    %s1987 = scalar_lea.sflag [#allocation3], 1
    %1988 = vsyncpa %s1987, 1
    %1989 = vsyncpa [#allocation4], 1
    %s1990 = scalar_lea.sflag [#allocation4], 1
    %1991 = vsyncpa %s1990, 1

</llo_original>
